<compile_context>
chip_gen: v7x
topology: tpu7x:2x2x1
jax: 0.10.0
libtpu: 0.0.40
codegen_flags: <defaults>
</compile_context>

<pallas_src>
import jax
import jax.numpy as jnp
from jax.experimental import pallas as pl
from jax.experimental.pallas import tpu as pltpu


def _pheno_kernel(gh1_ref, h1_ref, gh2_ref, h2_ref,
                  wd_ref, wn_ref, w1t_ref, ph_ref, p2_ref, out_ref):
    f32 = jnp.float32
    bf16 = jnp.bfloat16

    g1 = gh1_ref[...]          # (tb, L) f32, batch on sublanes / h_len on lanes
    a1 = h1_ref[...]
    g2 = gh2_ref[...]
    a2 = h2_ref[...]

    dot = None
    n1 = None
    n2 = None
    # Five accumulating contractions against static weight slices.  Each operand u_k is
    # computed (1-2 VPU ops, f32) right before its dot and consumed from vregs — no
    # concatenated (5L, tb) intermediate.  bf16 only at the MXU boundary.
    for k in range(5):
        if k == 0:
            ud, u1, u2 = g1 * g2, g1 * g1, g2 * g2
        elif k == 1:
            ud, u1, u2 = g1 * a2 + g2 * a1, g1 * a1, g2 * a2
        elif k == 2:
            ud, u1, u2 = a1 * a2, a1 * a1, a2 * a2
        elif k == 3:
            ud, u1, u2 = g1 + g2, g1, g2
        else:
            ud, u1, u2 = a1 + a2, a1, a2
        wd_k = wd_ref[k]       # (L, H) bf16 stationary weights; batch rows stream on MXU
        wn_k = wn_ref[k]       # (L, H) bf16, 2.0 factors pre-folded
        dk = jnp.dot(ud.astype(bf16), wd_k, preferred_element_type=f32)
        n1k = jnp.dot(u1.astype(bf16), wn_k, preferred_element_type=f32)
        n2k = jnp.dot(u2.astype(bf16), wn_k, preferred_element_type=f32)
        dot = dk if dot is None else dot + dk
        n1 = n1k if n1 is None else n1 + n1k
        n2 = n2k if n2 is None else n2 + n2k

    cc = ph_ref[0:1, :]        # (1, H) exact-f32 sum(C^2)
    osc = ph_ref[1:2, :]       # out_scale
    bia = ph_ref[2:3, :]       # bias
    b2 = ph_ref[3:4, 0:1]      # (1, 1)

    dot = dot + cc
    # Clamp each squared norm individually: bf16 cancellation can push them slightly
    # negative, and a negative*positive product would trip the eps clamp to garbage.
    n1 = jnp.maximum(n1 + cc, 0.0)
    n2 = jnp.maximum(n2 + cc, 0.0)

    # cos = dot / max(||x1||*||x2||, 1e-8) == dot * rsqrt(max(n1sq*n2sq, 1e-16))
    inv = jax.lax.rsqrt(jnp.maximum(n1 * n2, 1e-16))
    out_h = dot * inv * osc + bia                      # (tb, H)

    b1 = p2_ref[0:1, :]        # (1, 2H)
    w2 = p2_ref[1:2, :]        # (1, 2H)

    # linear1 + LeakyReLU(0.1)
    y = jnp.dot(out_h.astype(bf16), w1t_ref[...], preferred_element_type=f32) + b1
    y = jnp.maximum(y, 0.1 * y)

    # linear2 (N=1) as VPU multiply + lane reduce (avoids an N=1 MXU matmul)
    z = jnp.sum(y * w2, axis=1, keepdims=True) + b2    # (tb, 1)
    out_ref[...] = z.astype(out_ref.dtype)


def _pick_tb(B):
    """Generation-aware batch-block size (h_len rides the lanes, batch the sublanes)."""
    try:
        vmem = pltpu.get_tpu_info().vmem_capacity_bytes
    except Exception:
        vmem = 64 * 1024 * 1024
    cap = 1024 if vmem >= (96 << 20) else 512   # v5e/v6e: 128 MiB VMEM; v7x: 64 MiB
    if B <= 8:
        return 8
    # Prefer >= 2 grid blocks so the "parallel" batch axis can shard across v7x's 2 TCs.
    half = ((-(-B // 2)) + 7) // 8 * 8
    return min(cap, half)


def pheno_connect_forward(gh1, h1, gh2, h2, params, g_len, tb=None):
    B, L = gh1.shape
    H = params["out_scale"].shape[-1]
    H2 = 2 * H
    f32 = jnp.float32
    bf16 = jnp.bfloat16

    if tb is None:
        tb = _pick_tb(B)
    tb = max(8, ((tb + 7) // 8) * 8)
    B_pad = ((B + tb - 1) // tb) * tb
    nb = B_pad // tb

    # Zero-pad batch instead of an un-tiled fallback block (padded rows are sliced off).
    if B_pad != B:
        pad = ((0, B_pad - B), (0, 0))
        gh1 = jnp.pad(gh1, pad)
        h1 = jnp.pad(h1, pad)
        gh2 = jnp.pad(gh2, pad)
        h2 = jnp.pad(h2, pad)

    # ---- loop-invariant precompute (tiny (H, L) maps, done once per call) ----
    s = params["genes_hpo_scale"].reshape(H, 1).astype(f32)
    eg = jnp.exp(params["gen_bias"].reshape(H, 1).astype(f32))
    eh = jnp.exp(params["hpo_bias"].reshape(H, 1).astype(f32))
    p = params["hpo_par"].reshape(H, L).astype(f32)
    A = s * p
    Bm = s * eg * p
    C = (f32(g_len) * s * eh * (1.0 + eg)) * p

    # (5, L, H) bf16 weight stacks for the expanded dot / squared-norm contractions.
    wd = jnp.stack([A * A, A * Bm, Bm * Bm, A * C, Bm * C], axis=0)
    wn = jnp.stack([A * A, 2.0 * A * Bm, Bm * Bm, 2.0 * A * C, 2.0 * Bm * C], axis=0)
    wd = jnp.transpose(wd, (0, 2, 1)).astype(bf16)
    wn = jnp.transpose(wn, (0, 2, 1)).astype(bf16)

    cc = jnp.sum(C * C, axis=1)                                        # (H,), kept f32-exact
    ph = jnp.stack(
        [cc,
         params["out_scale"].reshape(H).astype(f32),
         params["bias"].reshape(H).astype(f32),
         jnp.broadcast_to(params["b2"].reshape(1).astype(f32), (H,))], axis=0)   # (4, H)
    p2 = jnp.stack(
        [params["b1"].reshape(H2).astype(f32),
         params["w2"].reshape(H2).astype(f32)], axis=0)                           # (2, 2H)
    w1t = params["w1"].reshape(H2, H).T.astype(bf16)                               # (H, 2H)

    data_spec = pl.BlockSpec((tb, L), lambda i: (i, 0))
    full = lambda shape: pl.BlockSpec(shape, lambda i: (0,) * len(shape))

    grid_spec = pltpu.PrefetchScalarGridSpec(
        num_scalar_prefetch=0,
        grid=(nb,),
        in_specs=[
            data_spec, data_spec, data_spec, data_spec,   # gh1, h1, gh2, h2 (natural layout)
            full((5, L, H)),                              # wd: [A^2, A*Bm, Bm^2, A*C, Bm*C]^T
            full((5, L, H)),                              # wn: same with 2.0 factors folded
            full((H, H2)),                                # linear1 weight, transposed, bf16
            full((4, H)),                                 # [sum(C^2), out_scale, bias, b2]
            full((2, H2)),                                # [b1, w2]
        ],
        out_specs=pl.BlockSpec((tb, 1), lambda i: (i, 0)),
    )

    out = pl.pallas_call(
        _pheno_kernel,
        out_shape=jax.ShapeDtypeStruct((B_pad, 1), jnp.float32),
        grid_spec=grid_spec,
        compiler_params=pltpu.CompilerParams(
            dimension_semantics=("parallel",),
            vmem_limit_bytes=32 * 1024 * 1024),   # <= physical on all gens; >> our footprint
    )(gh1, h1, gh2, h2, wd, wn, w1t, ph, p2)

    return out[:B]


def init_params(key, h_len, hidden_len):
    ks = jax.random.split(key, 10)
    nrm = lambda k, shape, mean, std: mean + std * jax.random.normal(k, shape, jnp.float32)
    H2 = hidden_len * 2
    lim1 = 1.0 / hidden_len ** 0.5
    lim2 = 1.0 / H2 ** 0.5
    return dict(
        hpo_par=nrm(ks[0], (hidden_len, h_len), 0.1, 0.02),       # (H, h_len, 1) squeezed
        out_scale=nrm(ks[1], (1, hidden_len), 1.3, 0.3),
        bias=nrm(ks[2], (1, hidden_len), 0.1, 0.1),
        genes_hpo_scale=nrm(ks[3], (1, hidden_len), 0.4, 0.1),
        hpo_bias=nrm(ks[4], (1, hidden_len), -1.0, 0.2),
        gen_bias=nrm(ks[5], (1, hidden_len), -3.0, 1.0),
        w1=jax.random.uniform(ks[6], (H2, hidden_len), jnp.float32, -lim1, lim1),
        b1=jax.random.uniform(ks[7], (H2,), jnp.float32, -lim1, lim1),
        w2=jax.random.uniform(ks[8], (1, H2), jnp.float32, -lim2, lim2),
        b2=jax.random.uniform(ks[9], (1,), jnp.float32, -lim2, lim2),
    )


def reference_forward(gh1, h1, gh2, h2, p, g_len):
    # Pure-JAX mirror of the PyTorch forward (eval mode, pp=False), all f32.
    H = p["out_scale"].shape[-1]
    s = p["genes_hpo_scale"].reshape(1, H, 1)
    eg = jnp.exp(p["gen_bias"]).reshape(1, H, 1)
    eh = jnp.exp(p["hpo_bias"]).reshape(1, H, 1)
    c = g_len * s * eh * (1.0 + eg)
    hp = p["hpo_par"][None, :, :]
    x1 = (gh1[:, None, :] * s + h1[:, None, :] * s * eg + c) * hp
    x2 = (gh2[:, None, :] * s + h2[:, None, :] * s * eg + c) * hp
    dot = jnp.sum(x1 * x2, -1)
    n1 = jnp.sqrt(jnp.sum(x1 * x1, -1))
    n2 = jnp.sqrt(jnp.sum(x2 * x2, -1))
    cos = dot / jnp.maximum(n1 * n2, 1e-8)
    out = cos * p["out_scale"] + p["bias"]
    y = out @ p["w1"].T + p["b1"]
    y = jnp.where(y > 0, y, 0.1 * y)
    return y @ p["w2"].T + p["b2"]


if __name__ == "__main__":
    B, h_len, hidden_len, g_len = 8, 128, 32, 16

    key = jax.random.PRNGKey(0)
    kp, kg1, kh1, kg2, kh2 = jax.random.split(key, 5)
    params = init_params(kp, h_len, hidden_len)

    gh1 = jax.random.normal(kg1, (B, h_len), jnp.float32)
    h1 = jax.random.normal(kh1, (B, h_len), jnp.float32)
    gh2 = jax.random.normal(kg2, (B, h_len), jnp.float32)
    h2 = jax.random.normal(kh2, (B, h_len), jnp.float32)

    out = pheno_connect_forward(gh1, h1, gh2, h2, params, g_len)
    out = jax.block_until_ready(out)

    ref = reference_forward(gh1, h1, gh2, h2, params, g_len)
    assert out.shape == (B, 1)
    # bf16 MXU operands + algebraically expanded cosine reorder/round the accumulation;
    # allow a modest tolerance against the pure-f32 reference.
    assert jnp.allclose(out, ref, atol=2e-2, rtol=2e-2), (out, ref)

    print("KERNEL_OK")
</pallas_src>

<mosaic_0001>
module attributes {stable_mosaic.version = 11 : i64} {
  func.func @_pheno_kernel(%arg0: i32, %arg1: memref<8x128xf32, #tpu.memory_space<vmem>>, %arg2: memref<8x128xf32, #tpu.memory_space<vmem>>, %arg3: memref<8x128xf32, #tpu.memory_space<vmem>>, %arg4: memref<8x128xf32, #tpu.memory_space<vmem>>, %arg5: memref<5x128x32xbf16, #tpu.memory_space<vmem>>, %arg6: memref<5x128x32xbf16, #tpu.memory_space<vmem>>, %arg7: memref<32x64xbf16, #tpu.memory_space<vmem>>, %arg8: memref<4x32xf32, #tpu.memory_space<vmem>>, %arg9: memref<2x64xf32, #tpu.memory_space<vmem>>, %arg10: memref<8x1xf32, #tpu.memory_space<vmem>>) attributes {dimension_semantics = [#tpu.dimension_semantics<parallel>], iteration_bounds = array<i64: 1>, scalar_prefetch = 0 : i64, scratch_operands = 0 : i64, tpu.core_type = #tpu.core_type<tc>, window_params = [{transform_indices = @transform_0, window_bounds = array<i64: 8, 128>}, {transform_indices = @transform_1, window_bounds = array<i64: 8, 128>}, {transform_indices = @transform_2, window_bounds = array<i64: 8, 128>}, {transform_indices = @transform_3, window_bounds = array<i64: 8, 128>}, {pipeline_mode = #tpu.pipeline_mode<synchronous>, transform_indices = @transform_4, window_bounds = array<i64: 5, 128, 32>}, {pipeline_mode = #tpu.pipeline_mode<synchronous>, transform_indices = @transform_5, window_bounds = array<i64: 5, 128, 32>}, {pipeline_mode = #tpu.pipeline_mode<synchronous>, transform_indices = @transform_6, window_bounds = array<i64: 32, 64>}, {pipeline_mode = #tpu.pipeline_mode<synchronous>, transform_indices = @transform_7, window_bounds = array<i64: 4, 32>}, {pipeline_mode = #tpu.pipeline_mode<synchronous>, transform_indices = @transform_8, window_bounds = array<i64: 2, 64>}, {transform_indices = @transform_9, window_bounds = array<i64: 8, 1>}]} {
    %c0 = arith.constant 0 : index
    %c0_0 = arith.constant 0 : index
    %0 = vector.load %arg1[%c0, %c0_0] : memref<8x128xf32, #tpu.memory_space<vmem>>, vector<8x128xf32>
    %c0_1 = arith.constant 0 : index
    %c0_2 = arith.constant 0 : index
    %1 = vector.load %arg2[%c0_1, %c0_2] : memref<8x128xf32, #tpu.memory_space<vmem>>, vector<8x128xf32>
    %c0_3 = arith.constant 0 : index
    %c0_4 = arith.constant 0 : index
    %2 = vector.load %arg3[%c0_3, %c0_4] : memref<8x128xf32, #tpu.memory_space<vmem>>, vector<8x128xf32>
    %c0_5 = arith.constant 0 : index
    %c0_6 = arith.constant 0 : index
    %3 = vector.load %arg4[%c0_5, %c0_6] : memref<8x128xf32, #tpu.memory_space<vmem>>, vector<8x128xf32>
    %4 = arith.mulf %0, %2 : vector<8x128xf32>
    %5 = arith.mulf %0, %0 : vector<8x128xf32>
    %6 = arith.mulf %2, %2 : vector<8x128xf32>
    %c0_7 = arith.constant 0 : index
    %c0_8 = arith.constant 0 : index
    %c0_9 = arith.constant 0 : index
    %7 = vector.load %arg5[%c0_7, %c0_8, %c0_9] : memref<5x128x32xbf16, #tpu.memory_space<vmem>>, vector<1x128x32xbf16>
    %8 = vector.shape_cast %7 : vector<1x128x32xbf16> to vector<128x32xbf16>
    %c0_10 = arith.constant 0 : index
    %c0_11 = arith.constant 0 : index
    %c0_12 = arith.constant 0 : index
    %9 = vector.load %arg6[%c0_10, %c0_11, %c0_12] : memref<5x128x32xbf16, #tpu.memory_space<vmem>>, vector<1x128x32xbf16>
    %10 = vector.shape_cast %9 : vector<1x128x32xbf16> to vector<128x32xbf16>
    %11 = arith.truncf %4 : vector<8x128xf32> to vector<8x128xbf16>
    %cst = arith.constant dense<0.000000e+00> : vector<8x32xf32>
    %12 = tpu.matmul %11, %8, %cst {dimension_numbers = #tpu.dot_dimension_numbers<[1], [0], [0], [1], [0, 0, 1, 1], [], []>} : vector<8x128xbf16>, vector<128x32xbf16>, vector<8x32xf32> -> vector<8x32xf32>
    %13 = arith.truncf %5 : vector<8x128xf32> to vector<8x128xbf16>
    %cst_13 = arith.constant dense<0.000000e+00> : vector<8x32xf32>
    %14 = tpu.matmul %13, %10, %cst_13 {dimension_numbers = #tpu.dot_dimension_numbers<[1], [0], [0], [1], [0, 0, 1, 1], [], []>} : vector<8x128xbf16>, vector<128x32xbf16>, vector<8x32xf32> -> vector<8x32xf32>
    %15 = arith.truncf %6 : vector<8x128xf32> to vector<8x128xbf16>
    %cst_14 = arith.constant dense<0.000000e+00> : vector<8x32xf32>
    %16 = tpu.matmul %15, %10, %cst_14 {dimension_numbers = #tpu.dot_dimension_numbers<[1], [0], [0], [1], [0, 0, 1, 1], [], []>} : vector<8x128xbf16>, vector<128x32xbf16>, vector<8x32xf32> -> vector<8x32xf32>
    %17 = arith.mulf %0, %3 : vector<8x128xf32>
    %18 = arith.mulf %2, %1 : vector<8x128xf32>
    %19 = arith.addf %17, %18 : vector<8x128xf32>
    %20 = arith.mulf %0, %1 : vector<8x128xf32>
    %21 = arith.mulf %2, %3 : vector<8x128xf32>
    %c1 = arith.constant 1 : index
    %c0_15 = arith.constant 0 : index
    %c0_16 = arith.constant 0 : index
    %22 = vector.load %arg5[%c1, %c0_15, %c0_16] : memref<5x128x32xbf16, #tpu.memory_space<vmem>>, vector<1x128x32xbf16>
    %23 = vector.shape_cast %22 : vector<1x128x32xbf16> to vector<128x32xbf16>
    %c1_17 = arith.constant 1 : index
    %c0_18 = arith.constant 0 : index
    %c0_19 = arith.constant 0 : index
    %24 = vector.load %arg6[%c1_17, %c0_18, %c0_19] : memref<5x128x32xbf16, #tpu.memory_space<vmem>>, vector<1x128x32xbf16>
    %25 = vector.shape_cast %24 : vector<1x128x32xbf16> to vector<128x32xbf16>
    %26 = arith.truncf %19 : vector<8x128xf32> to vector<8x128xbf16>
    %cst_20 = arith.constant dense<0.000000e+00> : vector<8x32xf32>
    %27 = tpu.matmul %26, %23, %cst_20 {dimension_numbers = #tpu.dot_dimension_numbers<[1], [0], [0], [1], [0, 0, 1, 1], [], []>} : vector<8x128xbf16>, vector<128x32xbf16>, vector<8x32xf32> -> vector<8x32xf32>
    %28 = arith.truncf %20 : vector<8x128xf32> to vector<8x128xbf16>
    %cst_21 = arith.constant dense<0.000000e+00> : vector<8x32xf32>
    %29 = tpu.matmul %28, %25, %cst_21 {dimension_numbers = #tpu.dot_dimension_numbers<[1], [0], [0], [1], [0, 0, 1, 1], [], []>} : vector<8x128xbf16>, vector<128x32xbf16>, vector<8x32xf32> -> vector<8x32xf32>
    %30 = arith.truncf %21 : vector<8x128xf32> to vector<8x128xbf16>
    %cst_22 = arith.constant dense<0.000000e+00> : vector<8x32xf32>
    %31 = tpu.matmul %30, %25, %cst_22 {dimension_numbers = #tpu.dot_dimension_numbers<[1], [0], [0], [1], [0, 0, 1, 1], [], []>} : vector<8x128xbf16>, vector<128x32xbf16>, vector<8x32xf32> -> vector<8x32xf32>
    %32 = arith.addf %12, %27 : vector<8x32xf32>
    %33 = arith.addf %14, %29 : vector<8x32xf32>
    %34 = arith.addf %16, %31 : vector<8x32xf32>
    %35 = arith.mulf %1, %3 : vector<8x128xf32>
    %36 = arith.mulf %1, %1 : vector<8x128xf32>
    %37 = arith.mulf %3, %3 : vector<8x128xf32>
    %c2 = arith.constant 2 : index
    %c0_23 = arith.constant 0 : index
    %c0_24 = arith.constant 0 : index
    %38 = vector.load %arg5[%c2, %c0_23, %c0_24] : memref<5x128x32xbf16, #tpu.memory_space<vmem>>, vector<1x128x32xbf16>
    %39 = vector.shape_cast %38 : vector<1x128x32xbf16> to vector<128x32xbf16>
    %c2_25 = arith.constant 2 : index
    %c0_26 = arith.constant 0 : index
    %c0_27 = arith.constant 0 : index
    %40 = vector.load %arg6[%c2_25, %c0_26, %c0_27] : memref<5x128x32xbf16, #tpu.memory_space<vmem>>, vector<1x128x32xbf16>
    %41 = vector.shape_cast %40 : vector<1x128x32xbf16> to vector<128x32xbf16>
    %42 = arith.truncf %35 : vector<8x128xf32> to vector<8x128xbf16>
    %cst_28 = arith.constant dense<0.000000e+00> : vector<8x32xf32>
    %43 = tpu.matmul %42, %39, %cst_28 {dimension_numbers = #tpu.dot_dimension_numbers<[1], [0], [0], [1], [0, 0, 1, 1], [], []>} : vector<8x128xbf16>, vector<128x32xbf16>, vector<8x32xf32> -> vector<8x32xf32>
    %44 = arith.truncf %36 : vector<8x128xf32> to vector<8x128xbf16>
    %cst_29 = arith.constant dense<0.000000e+00> : vector<8x32xf32>
    %45 = tpu.matmul %44, %41, %cst_29 {dimension_numbers = #tpu.dot_dimension_numbers<[1], [0], [0], [1], [0, 0, 1, 1], [], []>} : vector<8x128xbf16>, vector<128x32xbf16>, vector<8x32xf32> -> vector<8x32xf32>
    %46 = arith.truncf %37 : vector<8x128xf32> to vector<8x128xbf16>
    %cst_30 = arith.constant dense<0.000000e+00> : vector<8x32xf32>
    %47 = tpu.matmul %46, %41, %cst_30 {dimension_numbers = #tpu.dot_dimension_numbers<[1], [0], [0], [1], [0, 0, 1, 1], [], []>} : vector<8x128xbf16>, vector<128x32xbf16>, vector<8x32xf32> -> vector<8x32xf32>
    %48 = arith.addf %32, %43 : vector<8x32xf32>
    %49 = arith.addf %33, %45 : vector<8x32xf32>
    %50 = arith.addf %34, %47 : vector<8x32xf32>
    %51 = arith.addf %0, %2 : vector<8x128xf32>
    %c3 = arith.constant 3 : index
    %c0_31 = arith.constant 0 : index
    %c0_32 = arith.constant 0 : index
    %52 = vector.load %arg5[%c3, %c0_31, %c0_32] : memref<5x128x32xbf16, #tpu.memory_space<vmem>>, vector<1x128x32xbf16>
    %53 = vector.shape_cast %52 : vector<1x128x32xbf16> to vector<128x32xbf16>
    %c3_33 = arith.constant 3 : index
    %c0_34 = arith.constant 0 : index
    %c0_35 = arith.constant 0 : index
    %54 = vector.load %arg6[%c3_33, %c0_34, %c0_35] : memref<5x128x32xbf16, #tpu.memory_space<vmem>>, vector<1x128x32xbf16>
    %55 = vector.shape_cast %54 : vector<1x128x32xbf16> to vector<128x32xbf16>
    %56 = arith.truncf %51 : vector<8x128xf32> to vector<8x128xbf16>
    %cst_36 = arith.constant dense<0.000000e+00> : vector<8x32xf32>
    %57 = tpu.matmul %56, %53, %cst_36 {dimension_numbers = #tpu.dot_dimension_numbers<[1], [0], [0], [1], [0, 0, 1, 1], [], []>} : vector<8x128xbf16>, vector<128x32xbf16>, vector<8x32xf32> -> vector<8x32xf32>
    %58 = arith.truncf %0 : vector<8x128xf32> to vector<8x128xbf16>
    %cst_37 = arith.constant dense<0.000000e+00> : vector<8x32xf32>
    %59 = tpu.matmul %58, %55, %cst_37 {dimension_numbers = #tpu.dot_dimension_numbers<[1], [0], [0], [1], [0, 0, 1, 1], [], []>} : vector<8x128xbf16>, vector<128x32xbf16>, vector<8x32xf32> -> vector<8x32xf32>
    %60 = arith.truncf %2 : vector<8x128xf32> to vector<8x128xbf16>
    %cst_38 = arith.constant dense<0.000000e+00> : vector<8x32xf32>
    %61 = tpu.matmul %60, %55, %cst_38 {dimension_numbers = #tpu.dot_dimension_numbers<[1], [0], [0], [1], [0, 0, 1, 1], [], []>} : vector<8x128xbf16>, vector<128x32xbf16>, vector<8x32xf32> -> vector<8x32xf32>
    %62 = arith.addf %48, %57 : vector<8x32xf32>
    %63 = arith.addf %49, %59 : vector<8x32xf32>
    %64 = arith.addf %50, %61 : vector<8x32xf32>
    %65 = arith.addf %1, %3 : vector<8x128xf32>
    %c4 = arith.constant 4 : index
    %c0_39 = arith.constant 0 : index
    %c0_40 = arith.constant 0 : index
    %66 = vector.load %arg5[%c4, %c0_39, %c0_40] : memref<5x128x32xbf16, #tpu.memory_space<vmem>>, vector<1x128x32xbf16>
    %67 = vector.shape_cast %66 : vector<1x128x32xbf16> to vector<128x32xbf16>
    %c4_41 = arith.constant 4 : index
    %c0_42 = arith.constant 0 : index
    %c0_43 = arith.constant 0 : index
    %68 = vector.load %arg6[%c4_41, %c0_42, %c0_43] : memref<5x128x32xbf16, #tpu.memory_space<vmem>>, vector<1x128x32xbf16>
    %69 = vector.shape_cast %68 : vector<1x128x32xbf16> to vector<128x32xbf16>
    %70 = arith.truncf %65 : vector<8x128xf32> to vector<8x128xbf16>
    %cst_44 = arith.constant dense<0.000000e+00> : vector<8x32xf32>
    %71 = tpu.matmul %70, %67, %cst_44 {dimension_numbers = #tpu.dot_dimension_numbers<[1], [0], [0], [1], [0, 0, 1, 1], [], []>} : vector<8x128xbf16>, vector<128x32xbf16>, vector<8x32xf32> -> vector<8x32xf32>
    %72 = arith.truncf %1 : vector<8x128xf32> to vector<8x128xbf16>
    %cst_45 = arith.constant dense<0.000000e+00> : vector<8x32xf32>
    %73 = tpu.matmul %72, %69, %cst_45 {dimension_numbers = #tpu.dot_dimension_numbers<[1], [0], [0], [1], [0, 0, 1, 1], [], []>} : vector<8x128xbf16>, vector<128x32xbf16>, vector<8x32xf32> -> vector<8x32xf32>
    %74 = arith.truncf %3 : vector<8x128xf32> to vector<8x128xbf16>
    %cst_46 = arith.constant dense<0.000000e+00> : vector<8x32xf32>
    %75 = tpu.matmul %74, %69, %cst_46 {dimension_numbers = #tpu.dot_dimension_numbers<[1], [0], [0], [1], [0, 0, 1, 1], [], []>} : vector<8x128xbf16>, vector<128x32xbf16>, vector<8x32xf32> -> vector<8x32xf32>
    %76 = arith.addf %62, %71 : vector<8x32xf32>
    %77 = arith.addf %63, %73 : vector<8x32xf32>
    %78 = arith.addf %64, %75 : vector<8x32xf32>
    %c0_47 = arith.constant 0 : index
    %c0_48 = arith.constant 0 : index
    %79 = vector.load %arg8[%c0_47, %c0_48] : memref<4x32xf32, #tpu.memory_space<vmem>>, vector<1x32xf32>
    %c1_49 = arith.constant 1 : index
    %c0_50 = arith.constant 0 : index
    %80 = vector.load %arg8[%c1_49, %c0_50] : memref<4x32xf32, #tpu.memory_space<vmem>>, vector<1x32xf32>
    %c2_51 = arith.constant 2 : index
    %c0_52 = arith.constant 0 : index
    %81 = vector.load %arg8[%c2_51, %c0_52] : memref<4x32xf32, #tpu.memory_space<vmem>>, vector<1x32xf32>
    %c3_53 = arith.constant 3 : index
    %c0_54 = arith.constant 0 : index
    %82 = vector.load %arg8[%c3_53, %c0_54] : memref<4x32xf32, #tpu.memory_space<vmem>>, vector<1x1xf32>
    %83 = vector.broadcast %79 : vector<1x32xf32> to vector<8x32xf32>
    %84 = arith.addf %76, %83 : vector<8x32xf32>
    %85 = vector.broadcast %79 : vector<1x32xf32> to vector<8x32xf32>
    %86 = arith.addf %77, %85 : vector<8x32xf32>
    %cst_55 = arith.constant 0.000000e+00 : f32
    %87 = vector.broadcast %cst_55 : f32 to vector<8x32xf32>
    %88 = arith.maximumf %86, %87 : vector<8x32xf32>
    %89 = vector.broadcast %79 : vector<1x32xf32> to vector<8x32xf32>
    %90 = arith.addf %78, %89 : vector<8x32xf32>
    %cst_56 = arith.constant 0.000000e+00 : f32
    %91 = vector.broadcast %cst_56 : f32 to vector<8x32xf32>
    %92 = arith.maximumf %90, %91 : vector<8x32xf32>
    %93 = arith.mulf %88, %92 : vector<8x32xf32>
    %cst_57 = arith.constant 1.000000e-16 : f32
    %94 = vector.broadcast %cst_57 : f32 to vector<8x32xf32>
    %95 = arith.maximumf %93, %94 : vector<8x32xf32>
    %96 = math.rsqrt %95 : vector<8x32xf32>
    %97 = arith.mulf %84, %96 : vector<8x32xf32>
    %98 = vector.broadcast %80 : vector<1x32xf32> to vector<8x32xf32>
    %99 = arith.mulf %97, %98 : vector<8x32xf32>
    %100 = vector.broadcast %81 : vector<1x32xf32> to vector<8x32xf32>
    %101 = arith.addf %99, %100 : vector<8x32xf32>
    %c0_58 = arith.constant 0 : index
    %c0_59 = arith.constant 0 : index
    %102 = vector.load %arg9[%c0_58, %c0_59] : memref<2x64xf32, #tpu.memory_space<vmem>>, vector<1x64xf32>
    %c1_60 = arith.constant 1 : index
    %c0_61 = arith.constant 0 : index
    %103 = vector.load %arg9[%c1_60, %c0_61] : memref<2x64xf32, #tpu.memory_space<vmem>>, vector<1x64xf32>
    %104 = arith.truncf %101 : vector<8x32xf32> to vector<8x32xbf16>
    %c0_62 = arith.constant 0 : index
    %c0_63 = arith.constant 0 : index
    %105 = vector.load %arg7[%c0_62, %c0_63] : memref<32x64xbf16, #tpu.memory_space<vmem>>, vector<32x64xbf16>
    %cst_64 = arith.constant dense<0.000000e+00> : vector<8x64xf32>
    %106 = tpu.matmul %104, %105, %cst_64 {dimension_numbers = #tpu.dot_dimension_numbers<[1], [0], [0], [1], [0, 0, 1, 1], [], []>} : vector<8x32xbf16>, vector<32x64xbf16>, vector<8x64xf32> -> vector<8x64xf32>
    %107 = vector.broadcast %102 : vector<1x64xf32> to vector<8x64xf32>
    %108 = arith.addf %106, %107 : vector<8x64xf32>
    %cst_65 = arith.constant 1.000000e-01 : f32
    %109 = vector.broadcast %cst_65 : f32 to vector<8x64xf32>
    %110 = arith.mulf %109, %108 : vector<8x64xf32>
    %111 = arith.maximumf %108, %110 : vector<8x64xf32>
    %112 = vector.broadcast %103 : vector<1x64xf32> to vector<8x64xf32>
    %113 = arith.mulf %111, %112 : vector<8x64xf32>
    %cst_66 = arith.constant dense<0.000000e+00> : vector<8xf32>
    %114 = vector.multi_reduction <add>, %113, %cst_66 [1] : vector<8x64xf32> to vector<8xf32>
    %115 = vector.shape_cast %114 : vector<8xf32> to vector<8x1xf32>
    %116 = vector.broadcast %82 : vector<1x1xf32> to vector<8x1xf32>
    %117 = arith.addf %115, %116 : vector<8x1xf32>
    %c0_67 = arith.constant 0 : index
    %c0_68 = arith.constant 0 : index
    %118 = vector.load %arg10[%c0_67, %c0_68] : memref<8x1xf32, #tpu.memory_space<vmem>>, vector<8x1xf32>
    tpu.vector_store %arg10[%c0_67, %c0_68], %117 {strides = array<i32>} : memref<8x1xf32, #tpu.memory_space<vmem>>, vector<8x1xf32>,
    return
  }
  func.func @transform_0(%arg0: i32) -> (i32, i32) {
    %c0_i32 = arith.constant 0 : i32
    %c0_i32_0 = arith.constant 0 : i32
    return %arg0, %c0_i32 : i32, i32
  }
  func.func @transform_1(%arg0: i32) -> (i32, i32) {
    %c0_i32 = arith.constant 0 : i32
    %c0_i32_0 = arith.constant 0 : i32
    return %arg0, %c0_i32 : i32, i32
  }
  func.func @transform_2(%arg0: i32) -> (i32, i32) {
    %c0_i32 = arith.constant 0 : i32
    %c0_i32_0 = arith.constant 0 : i32
    return %arg0, %c0_i32 : i32, i32
  }
  func.func @transform_3(%arg0: i32) -> (i32, i32) {
    %c0_i32 = arith.constant 0 : i32
    %c0_i32_0 = arith.constant 0 : i32
    return %arg0, %c0_i32 : i32, i32
  }
  func.func @transform_4(%arg0: i32) -> (i32, i32, i32) {
    %c0_i32 = arith.constant 0 : i32
    %c0_i32_0 = arith.constant 0 : i32
    %c0_i32_1 = arith.constant 0 : i32
    %c0_i32_2 = arith.constant 0 : i32
    return %c0_i32, %c0_i32_0, %c0_i32_1 : i32, i32, i32
  }
  func.func @transform_5(%arg0: i32) -> (i32, i32, i32) {
    %c0_i32 = arith.constant 0 : i32
    %c0_i32_0 = arith.constant 0 : i32
    %c0_i32_1 = arith.constant 0 : i32
    %c0_i32_2 = arith.constant 0 : i32
    return %c0_i32, %c0_i32_0, %c0_i32_1 : i32, i32, i32
  }
  func.func @transform_6(%arg0: i32) -> (i32, i32) {
    %c0_i32 = arith.constant 0 : i32
    %c0_i32_0 = arith.constant 0 : i32
    %c0_i32_1 = arith.constant 0 : i32
    return %c0_i32, %c0_i32_0 : i32, i32
  }
  func.func @transform_7(%arg0: i32) -> (i32, i32) {
    %c0_i32 = arith.constant 0 : i32
    %c0_i32_0 = arith.constant 0 : i32
    %c0_i32_1 = arith.constant 0 : i32
    return %c0_i32, %c0_i32_0 : i32, i32
  }
  func.func @transform_8(%arg0: i32) -> (i32, i32) {
    %c0_i32 = arith.constant 0 : i32
    %c0_i32_0 = arith.constant 0 : i32
    %c0_i32_1 = arith.constant 0 : i32
    return %c0_i32, %c0_i32_0 : i32, i32
  }
  func.func @transform_9(%arg0: i32) -> (i32, i32) {
    %c0_i32 = arith.constant 0 : i32
    %c0_i32_0 = arith.constant 0 : i32
    return %arg0, %c0_i32 : i32, i32
  }
}

</mosaic_0001>

<llo_original>
// kernel: tpu_custom_call.1
$region0: #{tpu_custom_call.1}
  #allocation0 [shape = 'u32[]', space=smem, size = 0x4, offset = 0x4, fixed_abs, tag = 'smem constant byte address 0x4 - core index']
  #allocation1 [shape = 'u32[144,128]{1,0:T(1,128)}', space=vmem, size = 0x12000, scoped, tag = 'internal scratch']
  %s0 = inlined_call_operand.vmem [shape: f32[8,128], index: 0, kind: input, shape index: {}]
  %s1 = inlined_call_operand.vmem [shape: f32[8,128], index: 1, kind: input, shape index: {}]
  %s2 = inlined_call_operand.vmem [shape: f32[8,128], index: 2, kind: input, shape index: {}]
  %s3 = inlined_call_operand.vmem [shape: f32[8,128], index: 3, kind: input, shape index: {}]
  %s4 = inlined_call_operand.vmem [shape: bf16[5,128,32], index: 4, kind: input, shape index: {}]
  %s5 = inlined_call_operand.vmem [shape: bf16[5,128,32], index: 5, kind: input, shape index: {}]
  %s6 = inlined_call_operand.vmem [shape: bf16[32,64], index: 6, kind: input, shape index: {}]
  %s7 = inlined_call_operand.vmem [shape: f32[4,32], index: 7, kind: input, shape index: {}]
  %s8 = inlined_call_operand.vmem [shape: f32[2,64], index: 8, kind: input, shape index: {}]
  %s9 = inlined_call_operand.vmem [shape: f32[8,1], index: 9, kind: output, shape index: {}]
  %s10 = sld [smem:[#allocation0]]
  $region46: #{tpu_custom_call.1} parent=0
    _
  %s12 = ssub.s32 1, %s10
  %s13 = scalar_select 0, %s12, %s10
  // Predicated region
  $region2: #{tpu_custom_call.1} parent=0 // pred_check
    _
  $region3: #{tpu_custom_call.1} parent=0 // pred_check_branch
    %15 = sbr.rel (0) target = $region5
  $region4: #{tpu_custom_call.1} parent=0 // pred_region
    _
  $region5: #{tpu_custom_call.1} parent=0 // pred_fallthru
    _
  // Predicated region
  $region6: #{tpu_custom_call.1} parent=0 // pred_check
    _
  $region7: #{tpu_custom_call.1} parent=0 // pred_check_branch
    %17 = sbr.rel (0) target = $region9
  $region8: #{tpu_custom_call.1} parent=0 // pred_region
    _
  $region9: #{tpu_custom_call.1} parent=0 // pred_fallthru
    _
  // Predicated region
  $region10: #{tpu_custom_call.1} parent=0 // pred_check
    _
  $region11: #{tpu_custom_call.1} parent=0 // pred_check_branch
    %19 = sbr.rel (0) target = $region13
  $region12: #{tpu_custom_call.1} parent=0 // pred_region
    _
  $region13: #{tpu_custom_call.1} parent=0 // pred_fallthru
    _
  // Predicated region
  $region14: #{tpu_custom_call.1} parent=0 // pred_check
    _
  $region15: #{tpu_custom_call.1} parent=0 // pred_check_branch
    %21 = sbr.rel (0) target = $region17
  $region16: #{tpu_custom_call.1} parent=0 // pred_region
    _
  $region17: #{tpu_custom_call.1} parent=0 // pred_fallthru
    _
  // Predicated region
  $region18: #{tpu_custom_call.1} parent=0 // pred_check
    _
  $region19: #{tpu_custom_call.1} parent=0 // pred_check_branch
    %23 = sbr.rel (0) target = $region21
  $region20: #{tpu_custom_call.1} parent=0 // pred_region
    _
  $region21: #{tpu_custom_call.1} parent=0 // pred_fallthru
    _
  // Predicated region
  $region22: #{tpu_custom_call.1} parent=0 // pred_check
    _
  $region23: #{tpu_custom_call.1} parent=0 // pred_check_branch
    %25 = sbr.rel (0) target = $region25
  $region24: #{tpu_custom_call.1} parent=0 // pred_region
    _
  $region25: #{tpu_custom_call.1} parent=0 // pred_fallthru
    _
  // Predicated region
  $region26: #{tpu_custom_call.1} parent=0 // pred_check
    _
  $region27: #{tpu_custom_call.1} parent=0 // pred_check_branch
    %27 = sbr.rel (0) target = $region29
  $region28: #{tpu_custom_call.1} parent=0 // pred_region
    _
  $region29: #{tpu_custom_call.1} parent=0 // pred_fallthru
    _
  // Predicated region
  $region30: #{tpu_custom_call.1} parent=0 // pred_check
    _
  $region31: #{tpu_custom_call.1} parent=0 // pred_check_branch
    %29 = sbr.rel (0) target = $region33
  $region32: #{tpu_custom_call.1} parent=0 // pred_region
    _
  $region33: #{tpu_custom_call.1} parent=0 // pred_fallthru
    _
  // Predicated region
  $region34: #{tpu_custom_call.1} parent=0 // pred_check
    _
  $region35: #{tpu_custom_call.1} parent=0 // pred_check_branch
    %31 = sbr.rel (0) target = $region37
  $region36: #{tpu_custom_call.1} parent=0 // pred_region
    _
  $region37: #{tpu_custom_call.1} parent=0 // pred_fallthru
    _
  %v33 = vld [vmem:[%s0] sm:$0xff]
  %v34 = vld [vmem:[%s1] sm:$0xff]
  %v35 = vld [vmem:[%s2] sm:$0xff]
  %v36 = vld [vmem:[%s3] sm:$0xff]
  %v37 = vmul.f32 %v33, %v35
  %v38 = vmul.f32 %v33, %v33
  %v39 = vmul.f32 %v35, %v35
  %v40 = vld [vmem:[%s4] sm:$0xf]
  %v41 = vld [vmem:[%s4 + $0x4] sm:$0xf]
  %v42 = vld [vmem:[%s4 + $0x8] sm:$0xf]
  %v43 = vld [vmem:[%s4 + $0xc] sm:$0xf]
  %v44 = vld [vmem:[%s4 + $0x10] sm:$0xf]
  %v45 = vld [vmem:[%s4 + $0x14] sm:$0xf]
  %v46 = vld [vmem:[%s4 + $0x18] sm:$0xf]
  %v47 = vld [vmem:[%s4 + $0x1c] sm:$0xf]
  %v48 = vld [vmem:[%s4 + $0x20] sm:$0xf]
  %v49 = vld [vmem:[%s4 + $0x24] sm:$0xf]
  %v50 = vld [vmem:[%s4 + $0x28] sm:$0xf]
  %v51 = vld [vmem:[%s4 + $0x2c] sm:$0xf]
  %v52 = vld [vmem:[%s4 + $0x30] sm:$0xf]
  %v53 = vld [vmem:[%s4 + $0x34] sm:$0xf]
  %v54 = vld [vmem:[%s4 + $0x38] sm:$0xf]
  %v55 = vld [vmem:[%s4 + $0x3c] sm:$0xf]
  %v56 = vld [vmem:[%s5] sm:$0xf]
  %v57 = vld [vmem:[%s5 + $0x4] sm:$0xf]
  %v58 = vld [vmem:[%s5 + $0x8] sm:$0xf]
  %v59 = vld [vmem:[%s5 + $0xc] sm:$0xf]
  %v60 = vld [vmem:[%s5 + $0x10] sm:$0xf]
  %v61 = vld [vmem:[%s5 + $0x14] sm:$0xf]
  %v62 = vld [vmem:[%s5 + $0x18] sm:$0xf]
  %v63 = vld [vmem:[%s5 + $0x1c] sm:$0xf]
  %v64 = vld [vmem:[%s5 + $0x20] sm:$0xf]
  %v65 = vld [vmem:[%s5 + $0x24] sm:$0xf]
  %v66 = vld [vmem:[%s5 + $0x28] sm:$0xf]
  %v67 = vld [vmem:[%s5 + $0x2c] sm:$0xf]
  %v68 = vld [vmem:[%s5 + $0x30] sm:$0xf]
  %v69 = vld [vmem:[%s5 + $0x34] sm:$0xf]
  %v70 = vld [vmem:[%s5 + $0x38] sm:$0xf]
  %v71 = vld [vmem:[%s5 + $0x3c] sm:$0xf]
  %v72 = vpack.c.bf16 %v37, %v37
  %v73 = vpack.c.bf16 %v38, %v38
  %v74 = vpack.c.bf16 %v39, %v39
  %v75 = vmul.f32 %v33, %v36
  %v76 = vmul.f32 %v35, %v34
  %v77 = vadd.f32 %v75, %v76
  %v78 = vmul.f32 %v33, %v34
  %v79 = vmul.f32 %v35, %v36
  %s80 = scalar_lea.vmem %s4, 64
  %v81 = vld [vmem:[%s80] sm:$0xf]
  %v82 = vld [vmem:[%s80 + $0x4] sm:$0xf]
  %v83 = vld [vmem:[%s80 + $0x8] sm:$0xf]
  %v84 = vld [vmem:[%s80 + $0xc] sm:$0xf]
  %v85 = vld [vmem:[%s80 + $0x10] sm:$0xf]
  %v86 = vld [vmem:[%s80 + $0x14] sm:$0xf]
  %v87 = vld [vmem:[%s80 + $0x18] sm:$0xf]
  %v88 = vld [vmem:[%s80 + $0x1c] sm:$0xf]
  %v89 = vld [vmem:[%s80 + $0x20] sm:$0xf]
  %v90 = vld [vmem:[%s80 + $0x24] sm:$0xf]
  %v91 = vld [vmem:[%s80 + $0x28] sm:$0xf]
  %v92 = vld [vmem:[%s80 + $0x2c] sm:$0xf]
  %v93 = vld [vmem:[%s80 + $0x30] sm:$0xf]
  %v94 = vld [vmem:[%s80 + $0x34] sm:$0xf]
  %v95 = vld [vmem:[%s80 + $0x38] sm:$0xf]
  %v96 = vld [vmem:[%s80 + $0x3c] sm:$0xf]
  %s97 = scalar_lea.vmem %s5, 64
  %v98 = vld [vmem:[%s97] sm:$0xf]
  %v99 = vld [vmem:[%s97 + $0x4] sm:$0xf]
  %v100 = vld [vmem:[%s97 + $0x8] sm:$0xf]
  %v101 = vld [vmem:[%s97 + $0xc] sm:$0xf]
  %v102 = vld [vmem:[%s97 + $0x10] sm:$0xf]
  %v103 = vld [vmem:[%s97 + $0x14] sm:$0xf]
  %v104 = vld [vmem:[%s97 + $0x18] sm:$0xf]
  %v105 = vld [vmem:[%s97 + $0x1c] sm:$0xf]
  %v106 = vld [vmem:[%s97 + $0x20] sm:$0xf]
  %v107 = vld [vmem:[%s97 + $0x24] sm:$0xf]
  %v108 = vld [vmem:[%s97 + $0x28] sm:$0xf]
  %v109 = vld [vmem:[%s97 + $0x2c] sm:$0xf]
  %v110 = vld [vmem:[%s97 + $0x30] sm:$0xf]
  %v111 = vld [vmem:[%s97 + $0x34] sm:$0xf]
  %v112 = vld [vmem:[%s97 + $0x38] sm:$0xf]
  %v113 = vld [vmem:[%s97 + $0x3c] sm:$0xf]
  %v114 = vpack.c.bf16 %v77, %v77
  %v131 = vunpack.c.l.b16 %v81
  %v132 = vunpack.c.l.b16 %v82
  %v133 = vunpack.c.l.b16 %v83
  %v134 = vunpack.c.l.b16 %v84
  %v135 = vunpack.c.l.b16 %v85
  %v136 = vunpack.c.l.b16 %v86
  %v137 = vunpack.c.l.b16 %v87
  %v138 = vunpack.c.l.b16 %v88
  %v139 = vunpack.c.l.b16 %v89
  %v140 = vunpack.c.l.b16 %v90
  %v141 = vunpack.c.l.b16 %v91
  %v142 = vunpack.c.l.b16 %v92
  %v143 = vunpack.c.l.b16 %v93
  %v144 = vunpack.c.l.b16 %v94
  %v145 = vunpack.c.l.b16 %v95
  %v146 = vunpack.c.l.b16 %v96
  %v147 = vpack.c.b16 %v132, %v131
  %v148 = vpack.c.b16 %v134, %v133
  %v149 = vpack.c.b16 %v136, %v135
  %v150 = vpack.c.b16 %v138, %v137
  %v151 = vpack.c.b16 %v140, %v139
  %v152 = vpack.c.b16 %v142, %v141
  %v153 = vpack.c.b16 %v144, %v143
  %v154 = vpack.c.b16 %v146, %v145
  %163 = vmatprep.subr.bf16.mxu0 0
  %164 = vmatpush1.bf16.msra.mxu0 %v147
  %165 = vmatprep.subr.bf16.mxu0 0
  %166 = vmatpush1.bf16.msra.mxu0 %v148
  %167 = vmatprep.subr.bf16.mxu0 0
  %168 = vmatpush1.bf16.msra.mxu0 %v149
  %169 = vmatprep.subr.bf16.mxu0 0
  %170 = vmatpush1.bf16.msra.mxu0 %v150
  %171 = vmatprep.subr.bf16.mxu0 0
  %172 = vmatpush1.bf16.msra.mxu0 %v151
  %173 = vmatprep.subr.bf16.mxu0 0
  %174 = vmatpush1.bf16.msra.mxu0 %v152
  %175 = vmatprep.subr.bf16.mxu0 0
  %176 = vmatpush1.bf16.msra.mxu0 %v153
  %177 = vmatprep.subr.bf16.mxu0 0
  %178 = vmatpush1.bf16.msra.mxu0 %v154
  %179 = vmatprep.subr.bf16.mxu0 0
  %180 = vmatpush1.bf16.msra.mxu0 0
  %181 = vmatprep.subr.bf16.mxu0 0
  %182 = vmatpush1.bf16.msra.mxu0 0
  %183 = vmatprep.subr.bf16.mxu0 0
  %184 = vmatpush1.bf16.msra.mxu0 0
  %185 = vmatprep.subr.bf16.mxu0 0
  %186 = vmatpush1.bf16.msra.mxu0 0
  %187 = vmatprep.subr.bf16.mxu0 0
  %188 = vmatpush1.bf16.msra.mxu0 0
  %189 = vmatprep.subr.bf16.mxu0 0
  %190 = vmatpush1.bf16.msra.mxu0 0
  %191 = vmatprep.subr.bf16.mxu0 0
  %192 = vmatpush1.bf16.msra.mxu0 0
  %193 = vmatprep.subr.bf16.mxu0 0
  %194 = vmatpush1.bf16.msra.mxu0 0
  %195 = vmatprep.mubr.bf16.mxu0 0
  %196 = vmatmul.mubr.bf16.gmra.mrb[0].mxu0 %v114
  %v197 = vpop.f32.mrb[0].mxu0
  %v198 = vadd.f32 0.0, %v197
  %v199 = vpop.f32.mrb[0].mxu0
  %v200 = vpop.f32.mrb[0].mxu0
  %v201 = vpop.f32.mrb[0].mxu0
  %202 = vdwg.mxu0
  %v203 = vpack.c.bf16 %v78, %v78
  %v220 = vunpack.c.l.b16 %v98
  %v221 = vunpack.c.l.b16 %v99
  %v222 = vunpack.c.l.b16 %v100
  %v223 = vunpack.c.l.b16 %v101
  %v224 = vunpack.c.l.b16 %v102
  %v225 = vunpack.c.l.b16 %v103
  %v226 = vunpack.c.l.b16 %v104
  %v227 = vunpack.c.l.b16 %v105
  %v228 = vunpack.c.l.b16 %v106
  %v229 = vunpack.c.l.b16 %v107
  %v230 = vunpack.c.l.b16 %v108
  %v231 = vunpack.c.l.b16 %v109
  %v232 = vunpack.c.l.b16 %v110
  %v233 = vunpack.c.l.b16 %v111
  %v234 = vunpack.c.l.b16 %v112
  %v235 = vunpack.c.l.b16 %v113
  %v236 = vpack.c.b16 %v221, %v220
  %v237 = vpack.c.b16 %v223, %v222
  %v238 = vpack.c.b16 %v225, %v224
  %v239 = vpack.c.b16 %v227, %v226
  %v240 = vpack.c.b16 %v229, %v228
  %v241 = vpack.c.b16 %v231, %v230
  %v242 = vpack.c.b16 %v233, %v232
  %v243 = vpack.c.b16 %v235, %v234
  %252 = vmatprep.subr.bf16.mxu0 0
  %253 = vmatpush1.bf16.msra.mxu0 %v236
  %254 = vmatprep.subr.bf16.mxu0 0
  %255 = vmatpush1.bf16.msra.mxu0 %v237
  %256 = vmatprep.subr.bf16.mxu0 0
  %257 = vmatpush1.bf16.msra.mxu0 %v238
  %258 = vmatprep.subr.bf16.mxu0 0
  %259 = vmatpush1.bf16.msra.mxu0 %v239
  %260 = vmatprep.subr.bf16.mxu0 0
  %261 = vmatpush1.bf16.msra.mxu0 %v240
  %262 = vmatprep.subr.bf16.mxu0 0
  %263 = vmatpush1.bf16.msra.mxu0 %v241
  %264 = vmatprep.subr.bf16.mxu0 0
  %265 = vmatpush1.bf16.msra.mxu0 %v242
  %266 = vmatprep.subr.bf16.mxu0 0
  %267 = vmatpush1.bf16.msra.mxu0 %v243
  %268 = vmatprep.subr.bf16.mxu0 0
  %269 = vmatpush1.bf16.msra.mxu0 0
  %270 = vmatprep.subr.bf16.mxu0 0
  %271 = vmatpush1.bf16.msra.mxu0 0
  %272 = vmatprep.subr.bf16.mxu0 0
  %273 = vmatpush1.bf16.msra.mxu0 0
  %274 = vmatprep.subr.bf16.mxu0 0
  %275 = vmatpush1.bf16.msra.mxu0 0
  %276 = vmatprep.subr.bf16.mxu0 0
  %277 = vmatpush1.bf16.msra.mxu0 0
  %278 = vmatprep.subr.bf16.mxu0 0
  %279 = vmatpush1.bf16.msra.mxu0 0
  %280 = vmatprep.subr.bf16.mxu0 0
  %281 = vmatpush1.bf16.msra.mxu0 0
  %282 = vmatprep.subr.bf16.mxu0 0
  %283 = vmatpush1.bf16.msra.mxu0 0
  %284 = vmatprep.mubr.bf16.mxu0 0
  %285 = vmatmul.mubr.bf16.gmra.mrb[0].mxu0 %v203
  %v286 = vpop.f32.mrb[0].mxu0
  %v287 = vadd.f32 0.0, %v286
  %v288 = vpop.f32.mrb[0].mxu0
  %v289 = vpop.f32.mrb[0].mxu0
  %v290 = vpop.f32.mrb[0].mxu0
  %291 = vdwg.mxu0
  %v292 = vpack.c.bf16 %v79, %v79
  %293 = vmatprep.subr.bf16.mxu0 0
  %294 = vmatpush1.bf16.msra.mxu0 %v236
  %295 = vmatprep.subr.bf16.mxu0 0
  %296 = vmatpush1.bf16.msra.mxu0 %v237
  %297 = vmatprep.subr.bf16.mxu0 0
  %298 = vmatpush1.bf16.msra.mxu0 %v238
  %299 = vmatprep.subr.bf16.mxu0 0
  %300 = vmatpush1.bf16.msra.mxu0 %v239
  %301 = vmatprep.subr.bf16.mxu0 0
  %302 = vmatpush1.bf16.msra.mxu0 %v240
  %303 = vmatprep.subr.bf16.mxu0 0
  %304 = vmatpush1.bf16.msra.mxu0 %v241
  %305 = vmatprep.subr.bf16.mxu0 0
  %306 = vmatpush1.bf16.msra.mxu0 %v242
  %307 = vmatprep.subr.bf16.mxu0 0
  %308 = vmatpush1.bf16.msra.mxu0 %v243
  %309 = vmatprep.subr.bf16.mxu0 0
  %310 = vmatpush1.bf16.msra.mxu0 0
  %311 = vmatprep.subr.bf16.mxu0 0
  %312 = vmatpush1.bf16.msra.mxu0 0
  %313 = vmatprep.subr.bf16.mxu0 0
  %314 = vmatpush1.bf16.msra.mxu0 0
  %315 = vmatprep.subr.bf16.mxu0 0
  %316 = vmatpush1.bf16.msra.mxu0 0
  %317 = vmatprep.subr.bf16.mxu0 0
  %318 = vmatpush1.bf16.msra.mxu0 0
  %319 = vmatprep.subr.bf16.mxu0 0
  %320 = vmatpush1.bf16.msra.mxu0 0
  %321 = vmatprep.subr.bf16.mxu0 0
  %322 = vmatpush1.bf16.msra.mxu0 0
  %323 = vmatprep.subr.bf16.mxu0 0
  %324 = vmatpush1.bf16.msra.mxu0 0
  %325 = vmatprep.mubr.bf16.mxu0 0
  %326 = vmatmul.mubr.bf16.gmra.mrb[0].mxu0 %v292
  %v327 = vpop.f32.mrb[0].mxu0
  %v328 = vadd.f32 0.0, %v327
  %v329 = vpop.f32.mrb[0].mxu0
  %v330 = vpop.f32.mrb[0].mxu0
  %v331 = vpop.f32.mrb[0].mxu0
  %332 = vdwg.mxu0
  %v349 = vunpack.c.l.b16 %v40
  %v350 = vunpack.c.l.b16 %v41
  %v351 = vunpack.c.l.b16 %v42
  %v352 = vunpack.c.l.b16 %v43
  %v353 = vunpack.c.l.b16 %v44
  %v354 = vunpack.c.l.b16 %v45
  %v355 = vunpack.c.l.b16 %v46
  %v356 = vunpack.c.l.b16 %v47
  %v357 = vunpack.c.l.b16 %v48
  %v358 = vunpack.c.l.b16 %v49
  %v359 = vunpack.c.l.b16 %v50
  %v360 = vunpack.c.l.b16 %v51
  %v361 = vunpack.c.l.b16 %v52
  %v362 = vunpack.c.l.b16 %v53
  %v363 = vunpack.c.l.b16 %v54
  %v364 = vunpack.c.l.b16 %v55
  %v365 = vpack.c.b16 %v350, %v349
  %v366 = vpack.c.b16 %v352, %v351
  %v367 = vpack.c.b16 %v354, %v353
  %v368 = vpack.c.b16 %v356, %v355
  %v369 = vpack.c.b16 %v358, %v357
  %v370 = vpack.c.b16 %v360, %v359
  %v371 = vpack.c.b16 %v362, %v361
  %v372 = vpack.c.b16 %v364, %v363
  %381 = vmatprep.subr.bf16.mxu0 0
  %382 = vmatpush1.bf16.msra.mxu0 %v365
  %383 = vmatprep.subr.bf16.mxu0 0
  %384 = vmatpush1.bf16.msra.mxu0 %v366
  %385 = vmatprep.subr.bf16.mxu0 0
  %386 = vmatpush1.bf16.msra.mxu0 %v367
  %387 = vmatprep.subr.bf16.mxu0 0
  %388 = vmatpush1.bf16.msra.mxu0 %v368
  %389 = vmatprep.subr.bf16.mxu0 0
  %390 = vmatpush1.bf16.msra.mxu0 %v369
  %391 = vmatprep.subr.bf16.mxu0 0
  %392 = vmatpush1.bf16.msra.mxu0 %v370
  %393 = vmatprep.subr.bf16.mxu0 0
  %394 = vmatpush1.bf16.msra.mxu0 %v371
  %395 = vmatprep.subr.bf16.mxu0 0
  %396 = vmatpush1.bf16.msra.mxu0 %v372
  %397 = vmatprep.subr.bf16.mxu0 0
  %398 = vmatpush1.bf16.msra.mxu0 0
  %399 = vmatprep.subr.bf16.mxu0 0
  %400 = vmatpush1.bf16.msra.mxu0 0
  %401 = vmatprep.subr.bf16.mxu0 0
  %402 = vmatpush1.bf16.msra.mxu0 0
  %403 = vmatprep.subr.bf16.mxu0 0
  %404 = vmatpush1.bf16.msra.mxu0 0
  %405 = vmatprep.subr.bf16.mxu0 0
  %406 = vmatpush1.bf16.msra.mxu0 0
  %407 = vmatprep.subr.bf16.mxu0 0
  %408 = vmatpush1.bf16.msra.mxu0 0
  %409 = vmatprep.subr.bf16.mxu0 0
  %410 = vmatpush1.bf16.msra.mxu0 0
  %411 = vmatprep.subr.bf16.mxu0 0
  %412 = vmatpush1.bf16.msra.mxu0 0
  %413 = vmatprep.mubr.bf16.mxu0 0
  %414 = vmatmul.mubr.bf16.gmra.mrb[0].mxu0 %v72
  %v415 = vpop.f32.mrb[0].mxu0
  %v416 = vadd.f32 %v198, %v415
  %v417 = vpop.f32.mrb[0].mxu0
  %v418 = vpop.f32.mrb[0].mxu0
  %v419 = vpop.f32.mrb[0].mxu0
  %420 = vdwg.mxu0
  %v437 = vunpack.c.l.b16 %v56
  %v438 = vunpack.c.l.b16 %v57
  %v439 = vunpack.c.l.b16 %v58
  %v440 = vunpack.c.l.b16 %v59
  %v441 = vunpack.c.l.b16 %v60
  %v442 = vunpack.c.l.b16 %v61
  %v443 = vunpack.c.l.b16 %v62
  %v444 = vunpack.c.l.b16 %v63
  %v445 = vunpack.c.l.b16 %v64
  %v446 = vunpack.c.l.b16 %v65
  %v447 = vunpack.c.l.b16 %v66
  %v448 = vunpack.c.l.b16 %v67
  %v449 = vunpack.c.l.b16 %v68
  %v450 = vunpack.c.l.b16 %v69
  %v451 = vunpack.c.l.b16 %v70
  %v452 = vunpack.c.l.b16 %v71
  %v453 = vpack.c.b16 %v438, %v437
  %v454 = vpack.c.b16 %v440, %v439
  %v455 = vpack.c.b16 %v442, %v441
  %v456 = vpack.c.b16 %v444, %v443
  %v457 = vpack.c.b16 %v446, %v445
  %v458 = vpack.c.b16 %v448, %v447
  %v459 = vpack.c.b16 %v450, %v449
  %v460 = vpack.c.b16 %v452, %v451
  %469 = vmatprep.subr.bf16.mxu0 0
  %470 = vmatpush1.bf16.msra.mxu0 %v453
  %471 = vmatprep.subr.bf16.mxu0 0
  %472 = vmatpush1.bf16.msra.mxu0 %v454
  %473 = vmatprep.subr.bf16.mxu0 0
  %474 = vmatpush1.bf16.msra.mxu0 %v455
  %475 = vmatprep.subr.bf16.mxu0 0
  %476 = vmatpush1.bf16.msra.mxu0 %v456
  %477 = vmatprep.subr.bf16.mxu0 0
  %478 = vmatpush1.bf16.msra.mxu0 %v457
  %479 = vmatprep.subr.bf16.mxu0 0
  %480 = vmatpush1.bf16.msra.mxu0 %v458
  %481 = vmatprep.subr.bf16.mxu0 0
  %482 = vmatpush1.bf16.msra.mxu0 %v459
  %483 = vmatprep.subr.bf16.mxu0 0
  %484 = vmatpush1.bf16.msra.mxu0 %v460
  %485 = vmatprep.subr.bf16.mxu0 0
  %486 = vmatpush1.bf16.msra.mxu0 0
  %487 = vmatprep.subr.bf16.mxu0 0
  %488 = vmatpush1.bf16.msra.mxu0 0
  %489 = vmatprep.subr.bf16.mxu0 0
  %490 = vmatpush1.bf16.msra.mxu0 0
  %491 = vmatprep.subr.bf16.mxu0 0
  %492 = vmatpush1.bf16.msra.mxu0 0
  %493 = vmatprep.subr.bf16.mxu0 0
  %494 = vmatpush1.bf16.msra.mxu0 0
  %495 = vmatprep.subr.bf16.mxu0 0
  %496 = vmatpush1.bf16.msra.mxu0 0
  %497 = vmatprep.subr.bf16.mxu0 0
  %498 = vmatpush1.bf16.msra.mxu0 0
  %499 = vmatprep.subr.bf16.mxu0 0
  %500 = vmatpush1.bf16.msra.mxu0 0
  %501 = vmatprep.mubr.bf16.mxu0 0
  %502 = vmatmul.mubr.bf16.gmra.mrb[0].mxu0 %v73
  %v503 = vpop.f32.mrb[0].mxu0
  %v504 = vadd.f32 %v287, %v503
  %v505 = vpop.f32.mrb[0].mxu0
  %v506 = vpop.f32.mrb[0].mxu0
  %v507 = vpop.f32.mrb[0].mxu0
  %508 = vdwg.mxu0
  %509 = vmatprep.subr.bf16.mxu0 0
  %510 = vmatpush1.bf16.msra.mxu0 %v453
  %511 = vmatprep.subr.bf16.mxu0 0
  %512 = vmatpush1.bf16.msra.mxu0 %v454
  %513 = vmatprep.subr.bf16.mxu0 0
  %514 = vmatpush1.bf16.msra.mxu0 %v455
  %515 = vmatprep.subr.bf16.mxu0 0
  %516 = vmatpush1.bf16.msra.mxu0 %v456
  %517 = vmatprep.subr.bf16.mxu0 0
  %518 = vmatpush1.bf16.msra.mxu0 %v457
  %519 = vmatprep.subr.bf16.mxu0 0
  %520 = vmatpush1.bf16.msra.mxu0 %v458
  %521 = vmatprep.subr.bf16.mxu0 0
  %522 = vmatpush1.bf16.msra.mxu0 %v459
  %523 = vmatprep.subr.bf16.mxu0 0
  %524 = vmatpush1.bf16.msra.mxu0 %v460
  %525 = vmatprep.subr.bf16.mxu0 0
  %526 = vmatpush1.bf16.msra.mxu0 0
  %527 = vmatprep.subr.bf16.mxu0 0
  %528 = vmatpush1.bf16.msra.mxu0 0
  %529 = vmatprep.subr.bf16.mxu0 0
  %530 = vmatpush1.bf16.msra.mxu0 0
  %531 = vmatprep.subr.bf16.mxu0 0
  %532 = vmatpush1.bf16.msra.mxu0 0
  %533 = vmatprep.subr.bf16.mxu0 0
  %534 = vmatpush1.bf16.msra.mxu0 0
  %535 = vmatprep.subr.bf16.mxu0 0
  %536 = vmatpush1.bf16.msra.mxu0 0
  %537 = vmatprep.subr.bf16.mxu0 0
  %538 = vmatpush1.bf16.msra.mxu0 0
  %539 = vmatprep.subr.bf16.mxu0 0
  %540 = vmatpush1.bf16.msra.mxu0 0
  %541 = vmatprep.mubr.bf16.mxu0 0
  %542 = vmatmul.mubr.bf16.gmra.mrb[0].mxu0 %v74
  %v543 = vpop.f32.mrb[0].mxu0
  %v544 = vadd.f32 %v328, %v543
  %v545 = vpop.f32.mrb[0].mxu0
  %v546 = vpop.f32.mrb[0].mxu0
  %v547 = vpop.f32.mrb[0].mxu0
  %548 = vdwg.mxu0
  %v549 = vmul.f32 %v34, %v36
  %v550 = vmul.f32 %v34, %v34
  %v551 = vmul.f32 %v36, %v36
  %s552 = scalar_lea.vmem %s4, 128
  %v553 = vld [vmem:[%s552] sm:$0xf]
  %v554 = vld [vmem:[%s552 + $0x4] sm:$0xf]
  %v555 = vld [vmem:[%s552 + $0x8] sm:$0xf]
  %v556 = vld [vmem:[%s552 + $0xc] sm:$0xf]
  %v557 = vld [vmem:[%s552 + $0x10] sm:$0xf]
  %v558 = vld [vmem:[%s552 + $0x14] sm:$0xf]
  %v559 = vld [vmem:[%s552 + $0x18] sm:$0xf]
  %v560 = vld [vmem:[%s552 + $0x1c] sm:$0xf]
  %v561 = vld [vmem:[%s552 + $0x20] sm:$0xf]
  %v562 = vld [vmem:[%s552 + $0x24] sm:$0xf]
  %v563 = vld [vmem:[%s552 + $0x28] sm:$0xf]
  %v564 = vld [vmem:[%s552 + $0x2c] sm:$0xf]
  %v565 = vld [vmem:[%s552 + $0x30] sm:$0xf]
  %v566 = vld [vmem:[%s552 + $0x34] sm:$0xf]
  %v567 = vld [vmem:[%s552 + $0x38] sm:$0xf]
  %v568 = vld [vmem:[%s552 + $0x3c] sm:$0xf]
  %s569 = scalar_lea.vmem %s5, 128
  %v570 = vld [vmem:[%s569] sm:$0xf]
  %v571 = vld [vmem:[%s569 + $0x4] sm:$0xf]
  %v572 = vld [vmem:[%s569 + $0x8] sm:$0xf]
  %v573 = vld [vmem:[%s569 + $0xc] sm:$0xf]
  %v574 = vld [vmem:[%s569 + $0x10] sm:$0xf]
  %v575 = vld [vmem:[%s569 + $0x14] sm:$0xf]
  %v576 = vld [vmem:[%s569 + $0x18] sm:$0xf]
  %v577 = vld [vmem:[%s569 + $0x1c] sm:$0xf]
  %v578 = vld [vmem:[%s569 + $0x20] sm:$0xf]
  %v579 = vld [vmem:[%s569 + $0x24] sm:$0xf]
  %v580 = vld [vmem:[%s569 + $0x28] sm:$0xf]
  %v581 = vld [vmem:[%s569 + $0x2c] sm:$0xf]
  %v582 = vld [vmem:[%s569 + $0x30] sm:$0xf]
  %v583 = vld [vmem:[%s569 + $0x34] sm:$0xf]
  %v584 = vld [vmem:[%s569 + $0x38] sm:$0xf]
  %v585 = vld [vmem:[%s569 + $0x3c] sm:$0xf]
  %v586 = vpack.c.bf16 %v549, %v549
  %v603 = vunpack.c.l.b16 %v553
  %v604 = vunpack.c.l.b16 %v554
  %v605 = vunpack.c.l.b16 %v555
  %v606 = vunpack.c.l.b16 %v556
  %v607 = vunpack.c.l.b16 %v557
  %v608 = vunpack.c.l.b16 %v558
  %v609 = vunpack.c.l.b16 %v559
  %v610 = vunpack.c.l.b16 %v560
  %v611 = vunpack.c.l.b16 %v561
  %v612 = vunpack.c.l.b16 %v562
  %v613 = vunpack.c.l.b16 %v563
  %v614 = vunpack.c.l.b16 %v564
  %v615 = vunpack.c.l.b16 %v565
  %v616 = vunpack.c.l.b16 %v566
  %v617 = vunpack.c.l.b16 %v567
  %v618 = vunpack.c.l.b16 %v568
  %v619 = vpack.c.b16 %v604, %v603
  %v620 = vpack.c.b16 %v606, %v605
  %v621 = vpack.c.b16 %v608, %v607
  %v622 = vpack.c.b16 %v610, %v609
  %v623 = vpack.c.b16 %v612, %v611
  %v624 = vpack.c.b16 %v614, %v613
  %v625 = vpack.c.b16 %v616, %v615
  %v626 = vpack.c.b16 %v618, %v617
  %635 = vmatprep.subr.bf16.mxu0 0
  %636 = vmatpush1.bf16.msra.mxu0 %v619
  %637 = vmatprep.subr.bf16.mxu0 0
  %638 = vmatpush1.bf16.msra.mxu0 %v620
  %639 = vmatprep.subr.bf16.mxu0 0
  %640 = vmatpush1.bf16.msra.mxu0 %v621
  %641 = vmatprep.subr.bf16.mxu0 0
  %642 = vmatpush1.bf16.msra.mxu0 %v622
  %643 = vmatprep.subr.bf16.mxu0 0
  %644 = vmatpush1.bf16.msra.mxu0 %v623
  %645 = vmatprep.subr.bf16.mxu0 0
  %646 = vmatpush1.bf16.msra.mxu0 %v624
  %647 = vmatprep.subr.bf16.mxu0 0
  %648 = vmatpush1.bf16.msra.mxu0 %v625
  %649 = vmatprep.subr.bf16.mxu0 0
  %650 = vmatpush1.bf16.msra.mxu0 %v626
  %651 = vmatprep.subr.bf16.mxu0 0
  %652 = vmatpush1.bf16.msra.mxu0 0
  %653 = vmatprep.subr.bf16.mxu0 0
  %654 = vmatpush1.bf16.msra.mxu0 0
  %655 = vmatprep.subr.bf16.mxu0 0
  %656 = vmatpush1.bf16.msra.mxu0 0
  %657 = vmatprep.subr.bf16.mxu0 0
  %658 = vmatpush1.bf16.msra.mxu0 0
  %659 = vmatprep.subr.bf16.mxu0 0
  %660 = vmatpush1.bf16.msra.mxu0 0
  %661 = vmatprep.subr.bf16.mxu0 0
  %662 = vmatpush1.bf16.msra.mxu0 0
  %663 = vmatprep.subr.bf16.mxu0 0
  %664 = vmatpush1.bf16.msra.mxu0 0
  %665 = vmatprep.subr.bf16.mxu0 0
  %666 = vmatpush1.bf16.msra.mxu0 0
  %667 = vmatprep.mubr.bf16.mxu0 0
  %668 = vmatmul.mubr.bf16.gmra.mrb[0].mxu0 %v586
  %v669 = vpop.f32.mrb[0].mxu0
  %v670 = vadd.f32 0.0, %v669
  %v671 = vpop.f32.mrb[0].mxu0
  %v672 = vpop.f32.mrb[0].mxu0
  %v673 = vpop.f32.mrb[0].mxu0
  %674 = vdwg.mxu0
  %v675 = vpack.c.bf16 %v550, %v550
  %v692 = vunpack.c.l.b16 %v570
  %v693 = vunpack.c.l.b16 %v571
  %v694 = vunpack.c.l.b16 %v572
  %v695 = vunpack.c.l.b16 %v573
  %v696 = vunpack.c.l.b16 %v574
  %v697 = vunpack.c.l.b16 %v575
  %v698 = vunpack.c.l.b16 %v576
  %v699 = vunpack.c.l.b16 %v577
  %v700 = vunpack.c.l.b16 %v578
  %v701 = vunpack.c.l.b16 %v579
  %v702 = vunpack.c.l.b16 %v580
  %v703 = vunpack.c.l.b16 %v581
  %v704 = vunpack.c.l.b16 %v582
  %v705 = vunpack.c.l.b16 %v583
  %v706 = vunpack.c.l.b16 %v584
  %v707 = vunpack.c.l.b16 %v585
  %v708 = vpack.c.b16 %v693, %v692
  %v709 = vpack.c.b16 %v695, %v694
  %v710 = vpack.c.b16 %v697, %v696
  %v711 = vpack.c.b16 %v699, %v698
  %v712 = vpack.c.b16 %v701, %v700
  %v713 = vpack.c.b16 %v703, %v702
  %v714 = vpack.c.b16 %v705, %v704
  %v715 = vpack.c.b16 %v707, %v706
  %724 = vmatprep.subr.bf16.mxu0 0
  %725 = vmatpush1.bf16.msra.mxu0 %v708
  %726 = vmatprep.subr.bf16.mxu0 0
  %727 = vmatpush1.bf16.msra.mxu0 %v709
  %728 = vmatprep.subr.bf16.mxu0 0
  %729 = vmatpush1.bf16.msra.mxu0 %v710
  %730 = vmatprep.subr.bf16.mxu0 0
  %731 = vmatpush1.bf16.msra.mxu0 %v711
  %732 = vmatprep.subr.bf16.mxu0 0
  %733 = vmatpush1.bf16.msra.mxu0 %v712
  %734 = vmatprep.subr.bf16.mxu0 0
  %735 = vmatpush1.bf16.msra.mxu0 %v713
  %736 = vmatprep.subr.bf16.mxu0 0
  %737 = vmatpush1.bf16.msra.mxu0 %v714
  %738 = vmatprep.subr.bf16.mxu0 0
  %739 = vmatpush1.bf16.msra.mxu0 %v715
  %740 = vmatprep.subr.bf16.mxu0 0
  %741 = vmatpush1.bf16.msra.mxu0 0
  %742 = vmatprep.subr.bf16.mxu0 0
  %743 = vmatpush1.bf16.msra.mxu0 0
  %744 = vmatprep.subr.bf16.mxu0 0
  %745 = vmatpush1.bf16.msra.mxu0 0
  %746 = vmatprep.subr.bf16.mxu0 0
  %747 = vmatpush1.bf16.msra.mxu0 0
  %748 = vmatprep.subr.bf16.mxu0 0
  %749 = vmatpush1.bf16.msra.mxu0 0
  %750 = vmatprep.subr.bf16.mxu0 0
  %751 = vmatpush1.bf16.msra.mxu0 0
  %752 = vmatprep.subr.bf16.mxu0 0
  %753 = vmatpush1.bf16.msra.mxu0 0
  %754 = vmatprep.subr.bf16.mxu0 0
  %755 = vmatpush1.bf16.msra.mxu0 0
  %756 = vmatprep.mubr.bf16.mxu0 0
  %757 = vmatmul.mubr.bf16.gmra.mrb[0].mxu0 %v675
  %v758 = vpop.f32.mrb[0].mxu0
  %v759 = vadd.f32 0.0, %v758
  %v760 = vpop.f32.mrb[0].mxu0
  %v761 = vpop.f32.mrb[0].mxu0
  %v762 = vpop.f32.mrb[0].mxu0
  %763 = vdwg.mxu0
  %v764 = vpack.c.bf16 %v551, %v551
  %765 = vmatprep.subr.bf16.mxu0 0
  %766 = vmatpush1.bf16.msra.mxu0 %v708
  %767 = vmatprep.subr.bf16.mxu0 0
  %768 = vmatpush1.bf16.msra.mxu0 %v709
  %769 = vmatprep.subr.bf16.mxu0 0
  %770 = vmatpush1.bf16.msra.mxu0 %v710
  %771 = vmatprep.subr.bf16.mxu0 0
  %772 = vmatpush1.bf16.msra.mxu0 %v711
  %773 = vmatprep.subr.bf16.mxu0 0
  %774 = vmatpush1.bf16.msra.mxu0 %v712
  %775 = vmatprep.subr.bf16.mxu0 0
  %776 = vmatpush1.bf16.msra.mxu0 %v713
  %777 = vmatprep.subr.bf16.mxu0 0
  %778 = vmatpush1.bf16.msra.mxu0 %v714
  %779 = vmatprep.subr.bf16.mxu0 0
  %780 = vmatpush1.bf16.msra.mxu0 %v715
  %781 = vmatprep.subr.bf16.mxu0 0
  %782 = vmatpush1.bf16.msra.mxu0 0
  %783 = vmatprep.subr.bf16.mxu0 0
  %784 = vmatpush1.bf16.msra.mxu0 0
  %785 = vmatprep.subr.bf16.mxu0 0
  %786 = vmatpush1.bf16.msra.mxu0 0
  %787 = vmatprep.subr.bf16.mxu0 0
  %788 = vmatpush1.bf16.msra.mxu0 0
  %789 = vmatprep.subr.bf16.mxu0 0
  %790 = vmatpush1.bf16.msra.mxu0 0
  %791 = vmatprep.subr.bf16.mxu0 0
  %792 = vmatpush1.bf16.msra.mxu0 0
  %793 = vmatprep.subr.bf16.mxu0 0
  %794 = vmatpush1.bf16.msra.mxu0 0
  %795 = vmatprep.subr.bf16.mxu0 0
  %796 = vmatpush1.bf16.msra.mxu0 0
  %797 = vmatprep.mubr.bf16.mxu0 0
  %798 = vmatmul.mubr.bf16.gmra.mrb[0].mxu0 %v764
  %v799 = vpop.f32.mrb[0].mxu0
  %v800 = vadd.f32 0.0, %v799
  %v801 = vpop.f32.mrb[0].mxu0
  %v802 = vpop.f32.mrb[0].mxu0
  %v803 = vpop.f32.mrb[0].mxu0
  %804 = vdwg.mxu0
  %v805 = vadd.f32 %v416, %v670
  %v806 = vadd.f32 %v504, %v759
  %v807 = vadd.f32 %v544, %v800
  %v808 = vadd.f32 %v33, %v35
  %s809 = scalar_lea.vmem %s4, 192
  %v810 = vld [vmem:[%s809] sm:$0xf]
  %v811 = vld [vmem:[%s809 + $0x4] sm:$0xf]
  %v812 = vld [vmem:[%s809 + $0x8] sm:$0xf]
  %v813 = vld [vmem:[%s809 + $0xc] sm:$0xf]
  %v814 = vld [vmem:[%s809 + $0x10] sm:$0xf]
  %v815 = vld [vmem:[%s809 + $0x14] sm:$0xf]
  %v816 = vld [vmem:[%s809 + $0x18] sm:$0xf]
  %v817 = vld [vmem:[%s809 + $0x1c] sm:$0xf]
  %v818 = vld [vmem:[%s809 + $0x20] sm:$0xf]
  %v819 = vld [vmem:[%s809 + $0x24] sm:$0xf]
  %v820 = vld [vmem:[%s809 + $0x28] sm:$0xf]
  %v821 = vld [vmem:[%s809 + $0x2c] sm:$0xf]
  %v822 = vld [vmem:[%s809 + $0x30] sm:$0xf]
  %v823 = vld [vmem:[%s809 + $0x34] sm:$0xf]
  %v824 = vld [vmem:[%s809 + $0x38] sm:$0xf]
  %v825 = vld [vmem:[%s809 + $0x3c] sm:$0xf]
  %s826 = scalar_lea.vmem %s5, 192
  %v827 = vld [vmem:[%s826] sm:$0xf]
  %v828 = vld [vmem:[%s826 + $0x4] sm:$0xf]
  %v829 = vld [vmem:[%s826 + $0x8] sm:$0xf]
  %v830 = vld [vmem:[%s826 + $0xc] sm:$0xf]
  %v831 = vld [vmem:[%s826 + $0x10] sm:$0xf]
  %v832 = vld [vmem:[%s826 + $0x14] sm:$0xf]
  %v833 = vld [vmem:[%s826 + $0x18] sm:$0xf]
  %v834 = vld [vmem:[%s826 + $0x1c] sm:$0xf]
  %v835 = vld [vmem:[%s826 + $0x20] sm:$0xf]
  %v836 = vld [vmem:[%s826 + $0x24] sm:$0xf]
  %v837 = vld [vmem:[%s826 + $0x28] sm:$0xf]
  %v838 = vld [vmem:[%s826 + $0x2c] sm:$0xf]
  %v839 = vld [vmem:[%s826 + $0x30] sm:$0xf]
  %v840 = vld [vmem:[%s826 + $0x34] sm:$0xf]
  %v841 = vld [vmem:[%s826 + $0x38] sm:$0xf]
  %v842 = vld [vmem:[%s826 + $0x3c] sm:$0xf]
  %v843 = vpack.c.bf16 %v808, %v808
  %v860 = vunpack.c.l.b16 %v810
  %v861 = vunpack.c.l.b16 %v811
  %v862 = vunpack.c.l.b16 %v812
  %v863 = vunpack.c.l.b16 %v813
  %v864 = vunpack.c.l.b16 %v814
  %v865 = vunpack.c.l.b16 %v815
  %v866 = vunpack.c.l.b16 %v816
  %v867 = vunpack.c.l.b16 %v817
  %v868 = vunpack.c.l.b16 %v818
  %v869 = vunpack.c.l.b16 %v819
  %v870 = vunpack.c.l.b16 %v820
  %v871 = vunpack.c.l.b16 %v821
  %v872 = vunpack.c.l.b16 %v822
  %v873 = vunpack.c.l.b16 %v823
  %v874 = vunpack.c.l.b16 %v824
  %v875 = vunpack.c.l.b16 %v825
  %v876 = vpack.c.b16 %v861, %v860
  %v877 = vpack.c.b16 %v863, %v862
  %v878 = vpack.c.b16 %v865, %v864
  %v879 = vpack.c.b16 %v867, %v866
  %v880 = vpack.c.b16 %v869, %v868
  %v881 = vpack.c.b16 %v871, %v870
  %v882 = vpack.c.b16 %v873, %v872
  %v883 = vpack.c.b16 %v875, %v874
  %892 = vmatprep.subr.bf16.mxu0 0
  %893 = vmatpush1.bf16.msra.mxu0 %v876
  %894 = vmatprep.subr.bf16.mxu0 0
  %895 = vmatpush1.bf16.msra.mxu0 %v877
  %896 = vmatprep.subr.bf16.mxu0 0
  %897 = vmatpush1.bf16.msra.mxu0 %v878
  %898 = vmatprep.subr.bf16.mxu0 0
  %899 = vmatpush1.bf16.msra.mxu0 %v879
  %900 = vmatprep.subr.bf16.mxu0 0
  %901 = vmatpush1.bf16.msra.mxu0 %v880
  %902 = vmatprep.subr.bf16.mxu0 0
  %903 = vmatpush1.bf16.msra.mxu0 %v881
  %904 = vmatprep.subr.bf16.mxu0 0
  %905 = vmatpush1.bf16.msra.mxu0 %v882
  %906 = vmatprep.subr.bf16.mxu0 0
  %907 = vmatpush1.bf16.msra.mxu0 %v883
  %908 = vmatprep.subr.bf16.mxu0 0
  %909 = vmatpush1.bf16.msra.mxu0 0
  %910 = vmatprep.subr.bf16.mxu0 0
  %911 = vmatpush1.bf16.msra.mxu0 0
  %912 = vmatprep.subr.bf16.mxu0 0
  %913 = vmatpush1.bf16.msra.mxu0 0
  %914 = vmatprep.subr.bf16.mxu0 0
  %915 = vmatpush1.bf16.msra.mxu0 0
  %916 = vmatprep.subr.bf16.mxu0 0
  %917 = vmatpush1.bf16.msra.mxu0 0
  %918 = vmatprep.subr.bf16.mxu0 0
  %919 = vmatpush1.bf16.msra.mxu0 0
  %920 = vmatprep.subr.bf16.mxu0 0
  %921 = vmatpush1.bf16.msra.mxu0 0
  %922 = vmatprep.subr.bf16.mxu0 0
  %923 = vmatpush1.bf16.msra.mxu0 0
  %924 = vmatprep.mubr.bf16.mxu0 0
  %925 = vmatmul.mubr.bf16.gmra.mrb[0].mxu0 %v843
  %v926 = vpop.f32.mrb[0].mxu0
  %v927 = vadd.f32 0.0, %v926
  %v928 = vpop.f32.mrb[0].mxu0
  %v929 = vpop.f32.mrb[0].mxu0
  %v930 = vpop.f32.mrb[0].mxu0
  %931 = vdwg.mxu0
  %v932 = vpack.c.bf16 %v33, %v33
  %v949 = vunpack.c.l.b16 %v827
  %v950 = vunpack.c.l.b16 %v828
  %v951 = vunpack.c.l.b16 %v829
  %v952 = vunpack.c.l.b16 %v830
  %v953 = vunpack.c.l.b16 %v831
  %v954 = vunpack.c.l.b16 %v832
  %v955 = vunpack.c.l.b16 %v833
  %v956 = vunpack.c.l.b16 %v834
  %v957 = vunpack.c.l.b16 %v835
  %v958 = vunpack.c.l.b16 %v836
  %v959 = vunpack.c.l.b16 %v837
  %v960 = vunpack.c.l.b16 %v838
  %v961 = vunpack.c.l.b16 %v839
  %v962 = vunpack.c.l.b16 %v840
  %v963 = vunpack.c.l.b16 %v841
  %v964 = vunpack.c.l.b16 %v842
  %v965 = vpack.c.b16 %v950, %v949
  %v966 = vpack.c.b16 %v952, %v951
  %v967 = vpack.c.b16 %v954, %v953
  %v968 = vpack.c.b16 %v956, %v955
  %v969 = vpack.c.b16 %v958, %v957
  %v970 = vpack.c.b16 %v960, %v959
  %v971 = vpack.c.b16 %v962, %v961
  %v972 = vpack.c.b16 %v964, %v963
  %981 = vmatprep.subr.bf16.mxu0 0
  %982 = vmatpush1.bf16.msra.mxu0 %v965
  %983 = vmatprep.subr.bf16.mxu0 0
  %984 = vmatpush1.bf16.msra.mxu0 %v966
  %985 = vmatprep.subr.bf16.mxu0 0
  %986 = vmatpush1.bf16.msra.mxu0 %v967
  %987 = vmatprep.subr.bf16.mxu0 0
  %988 = vmatpush1.bf16.msra.mxu0 %v968
  %989 = vmatprep.subr.bf16.mxu0 0
  %990 = vmatpush1.bf16.msra.mxu0 %v969
  %991 = vmatprep.subr.bf16.mxu0 0
  %992 = vmatpush1.bf16.msra.mxu0 %v970
  %993 = vmatprep.subr.bf16.mxu0 0
  %994 = vmatpush1.bf16.msra.mxu0 %v971
  %995 = vmatprep.subr.bf16.mxu0 0
  %996 = vmatpush1.bf16.msra.mxu0 %v972
  %997 = vmatprep.subr.bf16.mxu0 0
  %998 = vmatpush1.bf16.msra.mxu0 0
  %999 = vmatprep.subr.bf16.mxu0 0
  %1000 = vmatpush1.bf16.msra.mxu0 0
  %1001 = vmatprep.subr.bf16.mxu0 0
  %1002 = vmatpush1.bf16.msra.mxu0 0
  %1003 = vmatprep.subr.bf16.mxu0 0
  %1004 = vmatpush1.bf16.msra.mxu0 0
  %1005 = vmatprep.subr.bf16.mxu0 0
  %1006 = vmatpush1.bf16.msra.mxu0 0
  %1007 = vmatprep.subr.bf16.mxu0 0
  %1008 = vmatpush1.bf16.msra.mxu0 0
  %1009 = vmatprep.subr.bf16.mxu0 0
  %1010 = vmatpush1.bf16.msra.mxu0 0
  %1011 = vmatprep.subr.bf16.mxu0 0
  %1012 = vmatpush1.bf16.msra.mxu0 0
  %1013 = vmatprep.mubr.bf16.mxu0 0
  %1014 = vmatmul.mubr.bf16.gmra.mrb[0].mxu0 %v932
  %v1015 = vpop.f32.mrb[0].mxu0
  %v1016 = vadd.f32 0.0, %v1015
  %v1017 = vpop.f32.mrb[0].mxu0
  %v1018 = vpop.f32.mrb[0].mxu0
  %v1019 = vpop.f32.mrb[0].mxu0
  %1020 = vdwg.mxu0
  %v1021 = vpack.c.bf16 %v35, %v35
  %1022 = vmatprep.subr.bf16.mxu0 0
  %1023 = vmatpush1.bf16.msra.mxu0 %v965
  %1024 = vmatprep.subr.bf16.mxu0 0
  %1025 = vmatpush1.bf16.msra.mxu0 %v966
  %1026 = vmatprep.subr.bf16.mxu0 0
  %1027 = vmatpush1.bf16.msra.mxu0 %v967
  %1028 = vmatprep.subr.bf16.mxu0 0
  %1029 = vmatpush1.bf16.msra.mxu0 %v968
  %1030 = vmatprep.subr.bf16.mxu0 0
  %1031 = vmatpush1.bf16.msra.mxu0 %v969
  %1032 = vmatprep.subr.bf16.mxu0 0
  %1033 = vmatpush1.bf16.msra.mxu0 %v970
  %1034 = vmatprep.subr.bf16.mxu0 0
  %1035 = vmatpush1.bf16.msra.mxu0 %v971
  %1036 = vmatprep.subr.bf16.mxu0 0
  %1037 = vmatpush1.bf16.msra.mxu0 %v972
  %1038 = vmatprep.subr.bf16.mxu0 0
  %1039 = vmatpush1.bf16.msra.mxu0 0
  %1040 = vmatprep.subr.bf16.mxu0 0
  %1041 = vmatpush1.bf16.msra.mxu0 0
  %1042 = vmatprep.subr.bf16.mxu0 0
  %1043 = vmatpush1.bf16.msra.mxu0 0
  %1044 = vmatprep.subr.bf16.mxu0 0
  %1045 = vmatpush1.bf16.msra.mxu0 0
  %1046 = vmatprep.subr.bf16.mxu0 0
  %1047 = vmatpush1.bf16.msra.mxu0 0
  %1048 = vmatprep.subr.bf16.mxu0 0
  %1049 = vmatpush1.bf16.msra.mxu0 0
  %1050 = vmatprep.subr.bf16.mxu0 0
  %1051 = vmatpush1.bf16.msra.mxu0 0
  %1052 = vmatprep.subr.bf16.mxu0 0
  %1053 = vmatpush1.bf16.msra.mxu0 0
  %1054 = vmatprep.mubr.bf16.mxu0 0
  %1055 = vmatmul.mubr.bf16.gmra.mrb[0].mxu0 %v1021
  %v1056 = vpop.f32.mrb[0].mxu0
  %v1057 = vadd.f32 0.0, %v1056
  %v1058 = vpop.f32.mrb[0].mxu0
  %v1059 = vpop.f32.mrb[0].mxu0
  %v1060 = vpop.f32.mrb[0].mxu0
  %1061 = vdwg.mxu0
  %v1062 = vadd.f32 %v805, %v927
  %v1063 = vadd.f32 %v806, %v1016
  %v1064 = vadd.f32 %v807, %v1057
  %v1065 = vadd.f32 %v34, %v36
  %s1066 = scalar_lea.vmem %s4, 256
  %v1067 = vld [vmem:[%s1066] sm:$0xf]
  %v1068 = vld [vmem:[%s1066 + $0x4] sm:$0xf]
  %v1069 = vld [vmem:[%s1066 + $0x8] sm:$0xf]
  %v1070 = vld [vmem:[%s1066 + $0xc] sm:$0xf]
  %v1071 = vld [vmem:[%s1066 + $0x10] sm:$0xf]
  %v1072 = vld [vmem:[%s1066 + $0x14] sm:$0xf]
  %v1073 = vld [vmem:[%s1066 + $0x18] sm:$0xf]
  %v1074 = vld [vmem:[%s1066 + $0x1c] sm:$0xf]
  %v1075 = vld [vmem:[%s1066 + $0x20] sm:$0xf]
  %v1076 = vld [vmem:[%s1066 + $0x24] sm:$0xf]
  %v1077 = vld [vmem:[%s1066 + $0x28] sm:$0xf]
  %v1078 = vld [vmem:[%s1066 + $0x2c] sm:$0xf]
  %v1079 = vld [vmem:[%s1066 + $0x30] sm:$0xf]
  %v1080 = vld [vmem:[%s1066 + $0x34] sm:$0xf]
  %v1081 = vld [vmem:[%s1066 + $0x38] sm:$0xf]
  %v1082 = vld [vmem:[%s1066 + $0x3c] sm:$0xf]
  %s1083 = scalar_lea.vmem %s5, 256
  %v1084 = vld [vmem:[%s1083] sm:$0xf]
  %v1085 = vld [vmem:[%s1083 + $0x4] sm:$0xf]
  %v1086 = vld [vmem:[%s1083 + $0x8] sm:$0xf]
  %v1087 = vld [vmem:[%s1083 + $0xc] sm:$0xf]
  %v1088 = vld [vmem:[%s1083 + $0x10] sm:$0xf]
  %v1089 = vld [vmem:[%s1083 + $0x14] sm:$0xf]
  %v1090 = vld [vmem:[%s1083 + $0x18] sm:$0xf]
  %v1091 = vld [vmem:[%s1083 + $0x1c] sm:$0xf]
  %v1092 = vld [vmem:[%s1083 + $0x20] sm:$0xf]
  %v1093 = vld [vmem:[%s1083 + $0x24] sm:$0xf]
  %v1094 = vld [vmem:[%s1083 + $0x28] sm:$0xf]
  %v1095 = vld [vmem:[%s1083 + $0x2c] sm:$0xf]
  %v1096 = vld [vmem:[%s1083 + $0x30] sm:$0xf]
  %v1097 = vld [vmem:[%s1083 + $0x34] sm:$0xf]
  %v1098 = vld [vmem:[%s1083 + $0x38] sm:$0xf]
  %v1099 = vld [vmem:[%s1083 + $0x3c] sm:$0xf]
  %v1100 = vpack.c.bf16 %v1065, %v1065
  %v1117 = vunpack.c.l.b16 %v1067
  %v1118 = vunpack.c.l.b16 %v1068
  %v1119 = vunpack.c.l.b16 %v1069
  %v1120 = vunpack.c.l.b16 %v1070
  %v1121 = vunpack.c.l.b16 %v1071
  %v1122 = vunpack.c.l.b16 %v1072
  %v1123 = vunpack.c.l.b16 %v1073
  %v1124 = vunpack.c.l.b16 %v1074
  %v1125 = vunpack.c.l.b16 %v1075
  %v1126 = vunpack.c.l.b16 %v1076
  %v1127 = vunpack.c.l.b16 %v1077
  %v1128 = vunpack.c.l.b16 %v1078
  %v1129 = vunpack.c.l.b16 %v1079
  %v1130 = vunpack.c.l.b16 %v1080
  %v1131 = vunpack.c.l.b16 %v1081
  %v1132 = vunpack.c.l.b16 %v1082
  %v1133 = vpack.c.b16 %v1118, %v1117
  %v1134 = vpack.c.b16 %v1120, %v1119
  %v1135 = vpack.c.b16 %v1122, %v1121
  %v1136 = vpack.c.b16 %v1124, %v1123
  %v1137 = vpack.c.b16 %v1126, %v1125
  %v1138 = vpack.c.b16 %v1128, %v1127
  %v1139 = vpack.c.b16 %v1130, %v1129
  %v1140 = vpack.c.b16 %v1132, %v1131
  %1149 = vmatprep.subr.bf16.mxu0 0
  %1150 = vmatpush1.bf16.msra.mxu0 %v1133
  %1151 = vmatprep.subr.bf16.mxu0 0
  %1152 = vmatpush1.bf16.msra.mxu0 %v1134
  %1153 = vmatprep.subr.bf16.mxu0 0
  %1154 = vmatpush1.bf16.msra.mxu0 %v1135
  %1155 = vmatprep.subr.bf16.mxu0 0
  %1156 = vmatpush1.bf16.msra.mxu0 %v1136
  %1157 = vmatprep.subr.bf16.mxu0 0
  %1158 = vmatpush1.bf16.msra.mxu0 %v1137
  %1159 = vmatprep.subr.bf16.mxu0 0
  %1160 = vmatpush1.bf16.msra.mxu0 %v1138
  %1161 = vmatprep.subr.bf16.mxu0 0
  %1162 = vmatpush1.bf16.msra.mxu0 %v1139
  %1163 = vmatprep.subr.bf16.mxu0 0
  %1164 = vmatpush1.bf16.msra.mxu0 %v1140
  %1165 = vmatprep.subr.bf16.mxu0 0
  %1166 = vmatpush1.bf16.msra.mxu0 0
  %1167 = vmatprep.subr.bf16.mxu0 0
  %1168 = vmatpush1.bf16.msra.mxu0 0
  %1169 = vmatprep.subr.bf16.mxu0 0
  %1170 = vmatpush1.bf16.msra.mxu0 0
  %1171 = vmatprep.subr.bf16.mxu0 0
  %1172 = vmatpush1.bf16.msra.mxu0 0
  %1173 = vmatprep.subr.bf16.mxu0 0
  %1174 = vmatpush1.bf16.msra.mxu0 0
  %1175 = vmatprep.subr.bf16.mxu0 0
  %1176 = vmatpush1.bf16.msra.mxu0 0
  %1177 = vmatprep.subr.bf16.mxu0 0
  %1178 = vmatpush1.bf16.msra.mxu0 0
  %1179 = vmatprep.subr.bf16.mxu0 0
  %1180 = vmatpush1.bf16.msra.mxu0 0
  %1181 = vmatprep.mubr.bf16.mxu0 0
  %1182 = vmatmul.mubr.bf16.gmra.mrb[0].mxu0 %v1100
  %v1183 = vpop.f32.mrb[0].mxu0
  %v1184 = vadd.f32 0.0, %v1183
  %v1185 = vpop.f32.mrb[0].mxu0
  %v1186 = vpop.f32.mrb[0].mxu0
  %v1187 = vpop.f32.mrb[0].mxu0
  %1188 = vdwg.mxu0
  %v1189 = vpack.c.bf16 %v34, %v34
  %v1206 = vunpack.c.l.b16 %v1084
  %v1207 = vunpack.c.l.b16 %v1085
  %v1208 = vunpack.c.l.b16 %v1086
  %v1209 = vunpack.c.l.b16 %v1087
  %v1210 = vunpack.c.l.b16 %v1088
  %v1211 = vunpack.c.l.b16 %v1089
  %v1212 = vunpack.c.l.b16 %v1090
  %v1213 = vunpack.c.l.b16 %v1091
  %v1214 = vunpack.c.l.b16 %v1092
  %v1215 = vunpack.c.l.b16 %v1093
  %v1216 = vunpack.c.l.b16 %v1094
  %v1217 = vunpack.c.l.b16 %v1095
  %v1218 = vunpack.c.l.b16 %v1096
  %v1219 = vunpack.c.l.b16 %v1097
  %v1220 = vunpack.c.l.b16 %v1098
  %v1221 = vunpack.c.l.b16 %v1099
  %v1222 = vpack.c.b16 %v1207, %v1206
  %v1223 = vpack.c.b16 %v1209, %v1208
  %v1224 = vpack.c.b16 %v1211, %v1210
  %v1225 = vpack.c.b16 %v1213, %v1212
  %v1226 = vpack.c.b16 %v1215, %v1214
  %v1227 = vpack.c.b16 %v1217, %v1216
  %v1228 = vpack.c.b16 %v1219, %v1218
  %v1229 = vpack.c.b16 %v1221, %v1220
  %1238 = vmatprep.subr.bf16.mxu0 0
  %1239 = vmatpush1.bf16.msra.mxu0 %v1222
  %1240 = vmatprep.subr.bf16.mxu0 0
  %1241 = vmatpush1.bf16.msra.mxu0 %v1223
  %1242 = vmatprep.subr.bf16.mxu0 0
  %1243 = vmatpush1.bf16.msra.mxu0 %v1224
  %1244 = vmatprep.subr.bf16.mxu0 0
  %1245 = vmatpush1.bf16.msra.mxu0 %v1225
  %1246 = vmatprep.subr.bf16.mxu0 0
  %1247 = vmatpush1.bf16.msra.mxu0 %v1226
  %1248 = vmatprep.subr.bf16.mxu0 0
  %1249 = vmatpush1.bf16.msra.mxu0 %v1227
  %1250 = vmatprep.subr.bf16.mxu0 0
  %1251 = vmatpush1.bf16.msra.mxu0 %v1228
  %1252 = vmatprep.subr.bf16.mxu0 0
  %1253 = vmatpush1.bf16.msra.mxu0 %v1229
  %1254 = vmatprep.subr.bf16.mxu0 0
  %1255 = vmatpush1.bf16.msra.mxu0 0
  %1256 = vmatprep.subr.bf16.mxu0 0
  %1257 = vmatpush1.bf16.msra.mxu0 0
  %1258 = vmatprep.subr.bf16.mxu0 0
  %1259 = vmatpush1.bf16.msra.mxu0 0
  %1260 = vmatprep.subr.bf16.mxu0 0
  %1261 = vmatpush1.bf16.msra.mxu0 0
  %1262 = vmatprep.subr.bf16.mxu0 0
  %1263 = vmatpush1.bf16.msra.mxu0 0
  %1264 = vmatprep.subr.bf16.mxu0 0
  %1265 = vmatpush1.bf16.msra.mxu0 0
  %1266 = vmatprep.subr.bf16.mxu0 0
  %1267 = vmatpush1.bf16.msra.mxu0 0
  %1268 = vmatprep.subr.bf16.mxu0 0
  %1269 = vmatpush1.bf16.msra.mxu0 0
  %1270 = vmatprep.mubr.bf16.mxu0 0
  %1271 = vmatmul.mubr.bf16.gmra.mrb[0].mxu0 %v1189
  %v1272 = vpop.f32.mrb[0].mxu0
  %v1273 = vadd.f32 0.0, %v1272
  %v1274 = vpop.f32.mrb[0].mxu0
  %v1275 = vpop.f32.mrb[0].mxu0
  %v1276 = vpop.f32.mrb[0].mxu0
  %1277 = vdwg.mxu0
  %v1278 = vpack.c.bf16 %v36, %v36
  %1279 = vmatprep.subr.bf16.mxu0 0
  %1280 = vmatpush1.bf16.msra.mxu0 %v1222
  %1281 = vmatprep.subr.bf16.mxu0 0
  %1282 = vmatpush1.bf16.msra.mxu0 %v1223
  %1283 = vmatprep.subr.bf16.mxu0 0
  %1284 = vmatpush1.bf16.msra.mxu0 %v1224
  %1285 = vmatprep.subr.bf16.mxu0 0
  %1286 = vmatpush1.bf16.msra.mxu0 %v1225
  %1287 = vmatprep.subr.bf16.mxu0 0
  %1288 = vmatpush1.bf16.msra.mxu0 %v1226
  %1289 = vmatprep.subr.bf16.mxu0 0
  %1290 = vmatpush1.bf16.msra.mxu0 %v1227
  %1291 = vmatprep.subr.bf16.mxu0 0
  %1292 = vmatpush1.bf16.msra.mxu0 %v1228
  %1293 = vmatprep.subr.bf16.mxu0 0
  %1294 = vmatpush1.bf16.msra.mxu0 %v1229
  %1295 = vmatprep.subr.bf16.mxu0 0
  %1296 = vmatpush1.bf16.msra.mxu0 0
  %1297 = vmatprep.subr.bf16.mxu0 0
  %1298 = vmatpush1.bf16.msra.mxu0 0
  %1299 = vmatprep.subr.bf16.mxu0 0
  %1300 = vmatpush1.bf16.msra.mxu0 0
  %1301 = vmatprep.subr.bf16.mxu0 0
  %1302 = vmatpush1.bf16.msra.mxu0 0
  %1303 = vmatprep.subr.bf16.mxu0 0
  %1304 = vmatpush1.bf16.msra.mxu0 0
  %1305 = vmatprep.subr.bf16.mxu0 0
  %1306 = vmatpush1.bf16.msra.mxu0 0
  %1307 = vmatprep.subr.bf16.mxu0 0
  %1308 = vmatpush1.bf16.msra.mxu0 0
  %1309 = vmatprep.subr.bf16.mxu0 0
  %1310 = vmatpush1.bf16.msra.mxu0 0
  %1311 = vmatprep.mubr.bf16.mxu0 0
  %1312 = vmatmul.mubr.bf16.gmra.mrb[0].mxu0 %v1278
  %v1313 = vpop.f32.mrb[0].mxu0
  %v1314 = vadd.f32 0.0, %v1313
  %v1315 = vpop.f32.mrb[0].mxu0
  %v1316 = vpop.f32.mrb[0].mxu0
  %v1317 = vpop.f32.mrb[0].mxu0
  %1318 = vdwg.mxu0
  %v1319 = vadd.f32 %v1062, %v1184
  %v1320 = vadd.f32 %v1063, %v1273
  %v1321 = vadd.f32 %v1064, %v1314
  %v1322 = vld [vmem:[%s7] sm:$0x1]
  %v1323 = vld [vmem:[%s7 + $0x1] sm:$0x1]
  %v1324 = vld [vmem:[%s7 + $0x2] sm:$0x1]
  %v1325 = vld [vmem:[%s7 + $0x3] sm:$0x1]
  %v1326 = vlaneseq
  %v1327 = vshrl.u32 %v1326, 7
  %v1328 = vsub.s32 0, %v1327
  %v1329 = vrot.slane %v1322, %v1328
  %v1330 = vadd.f32 %v1319, %v1329
  %v1331 = vadd.f32 %v1320, %v1329
  %v1332 = vmax.f32 %v1331, 0.0
  %v1333 = vadd.f32 %v1321, %v1329
  %v1334 = vmax.f32 %v1333, 0.0
  %v1335 = vmul.f32 %v1332, %v1334
  %v1336 = vmax.f32 %v1335, 1e-16
  %v1337 = vrsqrt.pop %v1336
  %v1338 = vmul.f32 %v1330, %v1337
  %v1339 = vlaneseq
  %v1340 = vshrl.u32 %v1339, 7
  %v1341 = vsub.s32 0, %v1340
  %v1342 = vrot.slane %v1323, %v1341
  %v1343 = vmul.f32 %v1338, %v1342
  %v1344 = vlaneseq
  %v1345 = vshrl.u32 %v1344, 7
  %v1346 = vsub.s32 0, %v1345
  %v1347 = vrot.slane %v1324, %v1346
  %v1348 = vadd.f32 %v1343, %v1347
  %v1349 = vld [vmem:[%s8] sm:$0x1]
  %v1350 = vld [vmem:[%s8 + $0x1] sm:$0x1]
  %v1351 = vpack.c.bf16 %v1348, %v1348
  %v1352 = vld [vmem:[%s6] sm:$0xf]
  %v1353 = vld [vmem:[%s6 + $0x4] sm:$0xf]
  %v1354 = vld [vmem:[%s6 + $0x8] sm:$0xf]
  %v1355 = vld [vmem:[%s6 + $0xc] sm:$0xf]
  %v1356 = vlaneseq
  %v1357 = vshrl.u32 %v1356, 7
  %v1358 = vsub.s32 0, %v1357
  %v1359 = vrot.slane %v1349, %v1358
  %v1364 = vunpack.c.l.b16 %v1352
  %v1365 = vunpack.c.l.b16 %v1353
  %v1366 = vunpack.c.l.b16 %v1354
  %v1367 = vunpack.c.l.b16 %v1355
  %v1368 = vpack.c.b16 %v1365, %v1364
  %v1369 = vpack.c.b16 %v1367, %v1366
  %vm1372 = vcmask 261120
  %v1374 = vsel %vm1372, %v1351, 0
  %1376 = vmatprep.subr.bf16.mxu0 0
  %1377 = vmatpush1.bf16.msra.mxu0 %v1368
  %1378 = vmatprep.subr.bf16.mxu0 0
  %1379 = vmatpush1.bf16.msra.mxu0 %v1369
  %1380 = vmatprep.subr.bf16.mxu0 0
  %1381 = vmatpush1.bf16.msra.mxu0 0
  %1382 = vmatprep.subr.bf16.mxu0 0
  %1383 = vmatpush1.bf16.msra.mxu0 0
  %1384 = vmatprep.subr.bf16.mxu0 0
  %1385 = vmatpush1.bf16.msra.mxu0 0
  %1386 = vmatprep.subr.bf16.mxu0 0
  %1387 = vmatpush1.bf16.msra.mxu0 0
  %1388 = vmatprep.subr.bf16.mxu0 0
  %1389 = vmatpush1.bf16.msra.mxu0 0
  %1390 = vmatprep.subr.bf16.mxu0 0
  %1391 = vmatpush1.bf16.msra.mxu0 0
  %1392 = vmatprep.subr.bf16.mxu0 0
  %1393 = vmatpush1.bf16.msra.mxu0 0
  %1394 = vmatprep.subr.bf16.mxu0 0
  %1395 = vmatpush1.bf16.msra.mxu0 0
  %1396 = vmatprep.subr.bf16.mxu0 0
  %1397 = vmatpush1.bf16.msra.mxu0 0
  %1398 = vmatprep.subr.bf16.mxu0 0
  %1399 = vmatpush1.bf16.msra.mxu0 0
  %1400 = vmatprep.subr.bf16.mxu0 0
  %1401 = vmatpush1.bf16.msra.mxu0 0
  %1402 = vmatprep.subr.bf16.mxu0 0
  %1403 = vmatpush1.bf16.msra.mxu0 0
  %1404 = vmatprep.subr.bf16.mxu0 0
  %1405 = vmatpush1.bf16.msra.mxu0 0
  %1406 = vmatprep.subr.bf16.mxu0 0
  %1407 = vmatpush1.bf16.msra.mxu0 0
  %1408 = vmatprep.mubr.bf16.mxu0 0
  %1409 = vmatmul.mubr.bf16.gmra.mrb[0].mxu0 %v1374
  %v1410 = vpop.f32.mrb[0].mxu0
  %v1411 = vadd.f32 %v1359, %v1410
  %v1412 = vpop.f32.mrb[0].mxu0
  %v1413 = vpop.f32.mrb[0].mxu0
  %v1414 = vpop.f32.mrb[0].mxu0
  %1415 = vdwg.mxu0
  %v1416 = vmul.f32 %v1411, 0.1
  %v1417 = vmax.f32 %v1411, %v1416
  %v1418 = vlaneseq
  %v1419 = vshrl.u32 %v1418, 7
  %v1420 = vsub.s32 0, %v1419
  %v1421 = vrot.slane %v1350, %v1420
  %v1422 = vmul.f32 %v1417, %v1421
  %vm1423 = vcmask 523264
  %v1424 = vsel %vm1423, %v1422, 0.0
  %1425 = vadd.xlane.f32.xlu0 %v1424
  %v1426 = vpop.xlane.xlu0 %1425
  %v1427 = vlaneseq
  %v1428 = vshrl.u32 %v1427, 7
  %v1429 = vsub.s32 0, %v1428
  %v1430 = vrot.slane %v1325, %v1429
  %v1431 = vadd.f32 %v1426, %v1430
  %vm1432 = vcmask 7168
  %1433 = vst.msk [vmem:[%s9] sm:$0xff] %vm1432, %v1431
  // Predicated region
  $region38: #{tpu_custom_call.1} parent=0 // pred_check
    _
  $region39: #{tpu_custom_call.1} parent=0 // pred_check_branch
    %1435 = sbr.rel (0) target = $region41
  $region40: #{tpu_custom_call.1} parent=0 // pred_region
    _
  $region41: #{tpu_custom_call.1} parent=0 // pred_fallthru
    _
  // Predicated region
  $region42: #{tpu_custom_call.1} parent=0 // pred_check
    _
  $region43: #{tpu_custom_call.1} parent=0 // pred_check_branch
    %1437 = sbr.rel (0) target = $region45
  $region44: #{tpu_custom_call.1} parent=0 // pred_region
    _
  $region45: #{tpu_custom_call.1} parent=0 // pred_fallthru
    _

</llo_original>
